<compile_context>
chip_gen: v7x
topology: tpu7x:2x2x1
jax: 0.10.0
libtpu: 0.0.40
codegen_flags: <defaults>
</compile_context>

<pallas_src>
from functools import partial

import jax
import jax.numpy as jnp
from jax.experimental import pallas as pl
from jax.experimental.pallas import tpu as pltpu

K = 3          # kernel_size
STRIDE = 2
PAD = 1
OUT_PAD = 1
BN_EPS = 1e-5
MAX_BATCH_TILE = 256    # rows per grid step; whole (padded) batch fits one tile here


def _round_up(n, m):
    return ((n + m - 1) // m) * m


# ----------------------------- Pallas kernel --------------------------------

def _elu(x):
    # clamp before exp so large positives never hit inf on the dead branch
    return jnp.where(x > 0.0, x, jnp.exp(jnp.minimum(x, 0.0)) - 1.0)


def _make_decoder_kernel(num_layers, n_real, tile_n):
    """Fused decoder kernel.

    Ref order:
      x, fc_w, fc_b,
      [M_i, (gamma_i, beta_i, B_i, Bt_i)   -- BN layers
       M_i, b_i                            -- final layer],
      out
    Activations are flattened NHWC rows: lane index = (oh*OW + ow)*OC + oc.
    """
    def kernel(*refs):
        out_ref = refs[-1]
        it = iter(refs[:-1])
        x_ref, fcw_ref, fcb_ref = next(it), next(it), next(it)

        # rows of this batch tile that are real (not sublane padding)
        i = pl.program_id(0)
        n_valid = jnp.minimum(n_real - i * tile_n, tile_n)
        row_ids = jax.lax.broadcasted_iota(jnp.int32, (tile_n, 1), 0)
        mask = (row_ids < n_valid).astype(jnp.float32)

        # fc + ELU; view(bs, C, 1, 1) is a no-op in the flattened layout.
        h = jnp.dot(x_ref[...].astype(jnp.bfloat16), fcw_ref[...],
                    preferred_element_type=jnp.float32)
        h = _elu(h + fcb_ref[...])

        for li in range(num_layers):
            m_ref = next(it)
            # ConvTranspose2d as one bf16 MXU matmul on the flattened activation.
            y = jnp.dot(h.astype(jnp.bfloat16), m_ref[...],
                        preferred_element_type=jnp.float32)
            if li < num_layers - 1:
                # (deconv bias dropped: cancelled exactly by the BN mean subtraction)
                g_ref, beta_ref = next(it), next(it)
                bsel_ref, bselt_ref = next(it), next(it)
                bsel = bsel_ref[...]                         # (D, OC) 0/1 indicator
                oc = bsel.shape[1]
                s = y.shape[1] // oc                         # OH*OW (static)
                cnt = (n_valid * s).astype(jnp.float32)      # N*OH*OW over real rows

                # one pass over y: masked sum and sum-of-squares, reduced to channel
                # space with a single stacked (2, D) @ (D, OC) matmul.
                ym = y * mask
                stats = jnp.concatenate(
                    [jnp.sum(ym, axis=0, keepdims=True),
                     jnp.sum(ym * y, axis=0, keepdims=True)], axis=0)      # (2, D)
                stats_c = jnp.dot(stats, bsel,
                                  preferred_element_type=jnp.float32) / cnt
                mean_c = stats_c[0:1, :]
                # biased training-mode variance via E[y^2] - mean^2, clamped >= 0
                var_c = jnp.maximum(stats_c[1:2, :] - mean_c * mean_c, 0.0)
                scale_c = g_ref[...] * jax.lax.rsqrt(var_c + BN_EPS)
                shift_c = beta_ref[...] - mean_c * scale_c   # mean folded into shift
                # broadcast [scale; shift] back to lane layout with ONE matmul.
                aff = jnp.concatenate([scale_c, shift_c], axis=0)          # (2, OC)
                aff_f = jnp.dot(aff, bselt_ref[...],
                                preferred_element_type=jnp.float32)        # (2, D)
                y = _elu(y * aff_f[0:1, :] + aff_f[1:2, :])
            else:
                b_ref = next(it)
                y = y + b_ref[...]
            h = y

        out_ref[...] = h
    return kernel


# --------------------------- init-time preprocessing -------------------------

def _out_spatial(h):
    return (h - 1) * STRIDE - 2 * PAD + K + OUT_PAD


def _deconv_as_matrix(w_pt, h_in):
    """ConvTranspose2d(k=3, s=2, p=1, op=1) with PyTorch weight (IC, OC, K, K) as a
    dense matrix mapping flattened NHWC input (H*W*IC) -> flattened NHWC output
    (OH*OW*OC). Exact (the deconv is linear in its input); computed once at init."""
    ic, oc = int(w_pt.shape[0]), int(w_pt.shape[1])
    h_out = _out_spatial(h_in)
    # equivalent regular conv: dilate input by stride, pad, convolve with the
    # spatially flipped kernel.
    w_conv = jnp.transpose(jnp.flip(w_pt, axis=(2, 3)), (2, 3, 0, 1))  # (K, K, IC, OC)
    din = h_in * h_in * ic
    basis = jnp.eye(din, dtype=jnp.float32).reshape(din, h_in, h_in, ic)
    pad_lo = K - 1 - PAD
    pad_hi = K - 1 - PAD + OUT_PAD
    out = jax.lax.conv_general_dilated(
        basis, w_conv, window_strides=(1, 1),
        padding=((pad_lo, pad_hi), (pad_lo, pad_hi)),
        lhs_dilation=(STRIDE, STRIDE),
        dimension_numbers=("NHWC", "HWIO", "NHWC"))
    return out.reshape(din, h_out * h_out * oc)


def init_params(key, zdim, cnn_dims, out_channels):
    """Raw parameters in PyTorch layouts (ConvTranspose2d weight: (IC, OC, K, K))."""
    dims = list(cnn_dims)
    c0 = dims[-1]
    chans = dims[::-1] + [out_channels]              # e.g. [64, 32, 16, 8, 1]
    n_layers = len(chans) - 1
    keys = jax.random.split(key, 2 + 4 * n_layers)
    params = {
        "fc_w": 0.1 * jax.random.normal(keys[0], (zdim, c0), jnp.float32),
        "fc_b": 0.1 * jax.random.normal(keys[1], (c0,), jnp.float32),
        "layers": [],
    }
    ki = 2
    for i in range(n_layers):
        ic, oc = chans[i], chans[i + 1]
        w = 0.1 * jax.random.normal(keys[ki], (ic, oc, K, K), jnp.float32); ki += 1
        b = 0.1 * jax.random.normal(keys[ki], (oc,), jnp.float32); ki += 1
        if i < n_layers - 1:
            g = 1.0 + 0.1 * jax.random.normal(keys[ki], (oc,), jnp.float32); ki += 1
            beta = 0.1 * jax.random.normal(keys[ki], (oc,), jnp.float32); ki += 1
        else:
            g, beta = None, None
            ki += 2
        params["layers"].append({"w": w, "b": b, "gamma": g, "beta": beta})
    return params


def prepare_params(params):
    """Hoist every per-forward weight transform out of the hot path: deconv ->
    dense bf16 matrix, bias tiling, BN channel-indicator matrices, reshapes."""
    n_layers = len(params["layers"])
    prepared = {
        "fc_w": params["fc_w"].astype(jnp.bfloat16),
        "fc_b": params["fc_b"].reshape(1, -1).astype(jnp.float32),
        "layers": [],
    }
    h = 1
    for i, layer in enumerate(params["layers"]):
        oc = int(layer["w"].shape[1])
        h_out = _out_spatial(h)
        m = _deconv_as_matrix(layer["w"], h).astype(jnp.bfloat16)  # (H*H*IC, OH*OH*OC)
        entry = {"M": m}
        if i < n_layers - 1:
            # deconv bias intentionally dropped (cancelled by BN mean subtraction)
            eye = jnp.eye(oc, dtype=jnp.float32)
            entry.update({
                "gamma": layer["gamma"].reshape(1, -1).astype(jnp.float32),
                "beta": layer["beta"].reshape(1, -1).astype(jnp.float32),
                "B": jnp.tile(eye, (h_out * h_out, 1)),     # (OH*OW*OC, OC) reduce
                "Bt": jnp.tile(eye, (1, h_out * h_out)),    # (OC, OH*OW*OC) broadcast
            })
        else:
            entry["b"] = jnp.tile(layer["b"], (h_out * h_out,)) \
                            .reshape(1, -1).astype(jnp.float32)
        prepared["layers"].append(entry)
        h = h_out
    return prepared


# ------------------------------ forward --------------------------------------

@partial(jax.jit, static_argnames=("out_channels",))
def cnn_decoder_forward(prepared, x, out_channels=1):
    n_real, zdim = x.shape
    layers = prepared["layers"]
    num_layers = len(layers)

    # Pad the batch to full sublanes / a whole tile; BN statistics are masked to the
    # real rows inside the kernel so padding does not change the result.
    tile_n = min(MAX_BATCH_TILE, _round_up(n_real, 8))
    n_pad = _round_up(n_real, tile_n)
    grid = (n_pad // tile_n,)
    if n_pad != n_real:
        x = jnp.pad(x, ((0, n_pad - n_real), (0, 0)))
    # TODO(synk): when n_pad > tile_n (batches > MAX_BATCH_TILE) BatchNorm statistics
    # are computed per batch tile rather than over the whole batch.

    def resident(arr):   # full-array block + constant index_map -> DMA'd once, stays in VMEM
        return pl.BlockSpec(arr.shape, lambda i: (0, 0))

    args = [x, prepared["fc_w"], prepared["fc_b"]]
    in_specs = [pl.BlockSpec((tile_n, zdim), lambda i: (i, 0)),
                resident(prepared["fc_w"]), resident(prepared["fc_b"])]
    for li, layer in enumerate(layers):
        args.append(layer["M"]); in_specs.append(resident(layer["M"]))
        if li < num_layers - 1:
            for name in ("gamma", "beta", "B", "Bt"):
                args.append(layer[name]); in_specs.append(resident(layer[name]))
        else:
            args.append(layer["b"]); in_specs.append(resident(layer["b"]))

    d_out = layers[-1]["M"].shape[1]                 # 16*16*out_channels, lane-dense
    out_flat = pl.pallas_call(
        _make_decoder_kernel(num_layers, n_real, tile_n),
        out_shape=jax.ShapeDtypeStruct((n_pad, d_out), jnp.float32),
        grid=grid,
        in_specs=in_specs,
        out_specs=pl.BlockSpec((tile_n, d_out), lambda i: (i, 0)),
        compiler_params=pltpu.CompilerParams(
            dimension_semantics=("parallel",),          # megacore sharding on v7x
            vmem_limit_bytes=48 * 1024 * 1024),         # headroom above v5e default
    )(*args)

    out_flat = out_flat[:n_real]
    h_out = int(round((d_out // out_channels) ** 0.5))
    out_nhwc = out_flat.reshape(n_real, h_out, h_out, out_channels)
    # back to PyTorch NCHW (free reshape when out_channels == 1)
    return jnp.transpose(out_nhwc, (0, 3, 1, 2))


if __name__ == "__main__":
    zdim = 16
    cnn_dims = [8, 16, 32, 64]   # small version of the default [32, 64, 128, 256]
    out_channels = 1
    batch = 2

    key = jax.random.PRNGKey(0)
    pkey, xkey = jax.random.split(key)

    raw_params = init_params(pkey, zdim, cnn_dims, out_channels)
    prepared = prepare_params(raw_params)     # one-time weight preprocessing
    x = jax.random.normal(xkey, (batch, zdim), dtype=jnp.float32)

    out = cnn_decoder_forward(prepared, x, out_channels=out_channels)
    out = jax.block_until_ready(out)

    assert out.shape == (batch, out_channels, 16, 16), out.shape
    assert bool(jnp.all(jnp.isfinite(out)))
    print("KERNEL_OK")
</pallas_src>

<mosaic_0001>
module attributes {stable_mosaic.version = 11 : i64} {
  func.func @kernel(%arg0: i32, %arg1: memref<8x16xf32, #tpu.memory_space<vmem>>, %arg2: memref<16x64xbf16, #tpu.memory_space<vmem>>, %arg3: memref<1x64xf32, #tpu.memory_space<vmem>>, %arg4: memref<64x128xbf16, #tpu.memory_space<vmem>>, %arg5: memref<1x32xf32, #tpu.memory_space<vmem>>, %arg6: memref<1x32xf32, #tpu.memory_space<vmem>>, %arg7: memref<128x32xf32, #tpu.memory_space<vmem>>, %arg8: memref<32x128xf32, #tpu.memory_space<vmem>>, %arg9: memref<128x256xbf16, #tpu.memory_space<vmem>>, %arg10: memref<1x16xf32, #tpu.memory_space<vmem>>, %arg11: memref<1x16xf32, #tpu.memory_space<vmem>>, %arg12: memref<256x16xf32, #tpu.memory_space<vmem>>, %arg13: memref<16x256xf32, #tpu.memory_space<vmem>>, %arg14: memref<256x512xbf16, #tpu.memory_space<vmem>>, %arg15: memref<1x8xf32, #tpu.memory_space<vmem>>, %arg16: memref<1x8xf32, #tpu.memory_space<vmem>>, %arg17: memref<512x8xf32, #tpu.memory_space<vmem>>, %arg18: memref<8x512xf32, #tpu.memory_space<vmem>>, %arg19: memref<512x256xbf16, #tpu.memory_space<vmem>>, %arg20: memref<1x256xf32, #tpu.memory_space<vmem>>, %arg21: memref<8x256xf32, #tpu.memory_space<vmem>>) attributes {dimension_semantics = [#tpu.dimension_semantics<parallel>], iteration_bounds = array<i64: 1>, scalar_prefetch = 0 : i64, scratch_operands = 0 : i64, tpu.core_type = #tpu.core_type<tc>, window_params = [{transform_indices = @transform_0, window_bounds = array<i64: 8, 16>}, {pipeline_mode = #tpu.pipeline_mode<synchronous>, transform_indices = @transform_1, window_bounds = array<i64: 16, 64>}, {pipeline_mode = #tpu.pipeline_mode<synchronous>, transform_indices = @transform_2, window_bounds = array<i64: 1, 64>}, {pipeline_mode = #tpu.pipeline_mode<synchronous>, transform_indices = @transform_3, window_bounds = array<i64: 64, 128>}, {pipeline_mode = #tpu.pipeline_mode<synchronous>, transform_indices = @transform_4, window_bounds = array<i64: 1, 32>}, {pipeline_mode = #tpu.pipeline_mode<synchronous>, transform_indices = @transform_5, window_bounds = array<i64: 1, 32>}, {pipeline_mode = #tpu.pipeline_mode<synchronous>, transform_indices = @transform_6, window_bounds = array<i64: 128, 32>}, {pipeline_mode = #tpu.pipeline_mode<synchronous>, transform_indices = @transform_7, window_bounds = array<i64: 32, 128>}, {pipeline_mode = #tpu.pipeline_mode<synchronous>, transform_indices = @transform_8, window_bounds = array<i64: 128, 256>}, {pipeline_mode = #tpu.pipeline_mode<synchronous>, transform_indices = @transform_9, window_bounds = array<i64: 1, 16>}, {pipeline_mode = #tpu.pipeline_mode<synchronous>, transform_indices = @transform_10, window_bounds = array<i64: 1, 16>}, {pipeline_mode = #tpu.pipeline_mode<synchronous>, transform_indices = @transform_11, window_bounds = array<i64: 256, 16>}, {pipeline_mode = #tpu.pipeline_mode<synchronous>, transform_indices = @transform_12, window_bounds = array<i64: 16, 256>}, {pipeline_mode = #tpu.pipeline_mode<synchronous>, transform_indices = @transform_13, window_bounds = array<i64: 256, 512>}, {pipeline_mode = #tpu.pipeline_mode<synchronous>, transform_indices = @transform_14, window_bounds = array<i64: 1, 8>}, {pipeline_mode = #tpu.pipeline_mode<synchronous>, transform_indices = @transform_15, window_bounds = array<i64: 1, 8>}, {pipeline_mode = #tpu.pipeline_mode<synchronous>, transform_indices = @transform_16, window_bounds = array<i64: 512, 8>}, {pipeline_mode = #tpu.pipeline_mode<synchronous>, transform_indices = @transform_17, window_bounds = array<i64: 8, 512>}, {pipeline_mode = #tpu.pipeline_mode<synchronous>, transform_indices = @transform_18, window_bounds = array<i64: 512, 256>}, {pipeline_mode = #tpu.pipeline_mode<synchronous>, transform_indices = @transform_19, window_bounds = array<i64: 1, 256>}, {transform_indices = @transform_20, window_bounds = array<i64: 8, 256>}]} {
    %c8_i32 = arith.constant 8 : i32
    %0 = arith.muli %arg0, %c8_i32 : i32
    %c2_i32 = arith.constant 2 : i32
    %1 = arith.subi %c2_i32, %0 : i32
    %c8_i32_0 = arith.constant 8 : i32
    %2 = arith.minsi %1, %c8_i32_0 : i32
    %3 = tpu.iota {dimensions = array<i32: 0>} : vector<8x1xi32>
    %4 = vector.broadcast %2 : i32 to vector<8x1xi32>
    %5 = arith.cmpi slt, %3, %4 : vector<8x1xi32>
    %6 = arith.extui %5 : vector<8x1xi1> to vector<8x1xi32>
    %7 = arith.sitofp %6 : vector<8x1xi32> to vector<8x1xf32>
    %c0 = arith.constant 0 : index
    %c0_1 = arith.constant 0 : index
    %8 = vector.load %arg1[%c0, %c0_1] : memref<8x16xf32, #tpu.memory_space<vmem>>, vector<8x16xf32>
    %9 = arith.truncf %8 : vector<8x16xf32> to vector<8x16xbf16>
    %c0_2 = arith.constant 0 : index
    %c0_3 = arith.constant 0 : index
    %10 = vector.load %arg2[%c0_2, %c0_3] : memref<16x64xbf16, #tpu.memory_space<vmem>>, vector<16x64xbf16>
    %cst = arith.constant dense<0.000000e+00> : vector<8x64xf32>
    %11 = tpu.matmul %9, %10, %cst {dimension_numbers = #tpu.dot_dimension_numbers<[1], [0], [0], [1], [0, 0, 1, 1], [], []>} : vector<8x16xbf16>, vector<16x64xbf16>, vector<8x64xf32> -> vector<8x64xf32>
    %c0_4 = arith.constant 0 : index
    %c0_5 = arith.constant 0 : index
    %12 = vector.load %arg3[%c0_4, %c0_5] : memref<1x64xf32, #tpu.memory_space<vmem>>, vector<1x64xf32>
    %13 = vector.broadcast %12 : vector<1x64xf32> to vector<8x64xf32>
    %14 = arith.addf %11, %13 : vector<8x64xf32>
    %cst_6 = arith.constant 0.000000e+00 : f32
    %15 = vector.broadcast %cst_6 : f32 to vector<8x64xf32>
    %16 = arith.cmpf ogt, %14, %15 : vector<8x64xf32>
    %cst_7 = arith.constant 0.000000e+00 : f32
    %17 = vector.broadcast %cst_7 : f32 to vector<8x64xf32>
    %18 = arith.minimumf %14, %17 : vector<8x64xf32>
    %19 = math.exp %18 : vector<8x64xf32>
    %cst_8 = arith.constant 1.000000e+00 : f32
    %20 = vector.broadcast %cst_8 : f32 to vector<8x64xf32>
    %21 = arith.subf %19, %20 : vector<8x64xf32>
    %22 = arith.select %16, %14, %21 : vector<8x64xi1>, vector<8x64xf32>
    %23 = arith.truncf %22 : vector<8x64xf32> to vector<8x64xbf16>
    %c0_9 = arith.constant 0 : index
    %c0_10 = arith.constant 0 : index
    %24 = vector.load %arg4[%c0_9, %c0_10] : memref<64x128xbf16, #tpu.memory_space<vmem>>, vector<64x128xbf16>
    %cst_11 = arith.constant dense<0.000000e+00> : vector<8x128xf32>
    %25 = tpu.matmul %23, %24, %cst_11 {dimension_numbers = #tpu.dot_dimension_numbers<[1], [0], [0], [1], [0, 0, 1, 1], [], []>} : vector<8x64xbf16>, vector<64x128xbf16>, vector<8x128xf32> -> vector<8x128xf32>
    %c0_12 = arith.constant 0 : index
    %c0_13 = arith.constant 0 : index
    %26 = vector.load %arg7[%c0_12, %c0_13] : memref<128x32xf32, #tpu.memory_space<vmem>>, vector<128x32xf32>
    %c4_i32 = arith.constant 4 : i32
    %27 = arith.muli %2, %c4_i32 : i32
    %28 = arith.sitofp %27 : i32 to f32
    %29 = vector.broadcast %7 : vector<8x1xf32> to vector<8x128xf32>
    %30 = arith.mulf %25, %29 : vector<8x128xf32>
    %cst_14 = arith.constant dense<0.000000e+00> : vector<128xf32>
    %31 = vector.multi_reduction <add>, %30, %cst_14 [0] : vector<8x128xf32> to vector<128xf32>
    %32 = vector.shape_cast %31 : vector<128xf32> to vector<1x128xf32>
    %33 = arith.mulf %30, %25 : vector<8x128xf32>
    %cst_15 = arith.constant dense<0.000000e+00> : vector<128xf32>
    %34 = vector.multi_reduction <add>, %33, %cst_15 [0] : vector<8x128xf32> to vector<128xf32>
    %35 = vector.shape_cast %34 : vector<128xf32> to vector<1x128xf32>
    %36 = tpu.concatenate %32, %35 in 0 : vector<1x128xf32>, vector<1x128xf32> -> vector<2x128xf32>
    %cst_16 = arith.constant dense<0.000000e+00> : vector<2x32xf32>
    %37 = tpu.matmul %36, %26, %cst_16 {dimension_numbers = #tpu.dot_dimension_numbers<[1], [0], [0], [1], [0, 0, 1, 1], [], []>} : vector<2x128xf32>, vector<128x32xf32>, vector<2x32xf32> -> vector<2x32xf32>
    %38 = vector.broadcast %28 : f32 to vector<2x32xf32>
    %39 = arith.divf %37, %38 : vector<2x32xf32>
    %40 = vector.extract_strided_slice %39 {offsets = [0, 0], sizes = [1, 32], strides = [1, 1]} : vector<2x32xf32> to vector<1x32xf32>
    %41 = vector.extract_strided_slice %39 {offsets = [1, 0], sizes = [1, 32], strides = [1, 1]} : vector<2x32xf32> to vector<1x32xf32>
    %42 = arith.mulf %40, %40 : vector<1x32xf32>
    %43 = arith.subf %41, %42 : vector<1x32xf32>
    %cst_17 = arith.constant 0.000000e+00 : f32
    %44 = vector.broadcast %cst_17 : f32 to vector<1x32xf32>
    %45 = arith.maximumf %43, %44 : vector<1x32xf32>
    %c0_18 = arith.constant 0 : index
    %c0_19 = arith.constant 0 : index
    %46 = vector.load %arg5[%c0_18, %c0_19] : memref<1x32xf32, #tpu.memory_space<vmem>>, vector<1x32xf32>
    %cst_20 = arith.constant 9.99999974E-6 : f32
    %47 = vector.broadcast %cst_20 : f32 to vector<1x32xf32>
    %48 = arith.addf %45, %47 : vector<1x32xf32>
    %49 = math.rsqrt %48 : vector<1x32xf32>
    %50 = arith.mulf %46, %49 : vector<1x32xf32>
    %c0_21 = arith.constant 0 : index
    %c0_22 = arith.constant 0 : index
    %51 = vector.load %arg6[%c0_21, %c0_22] : memref<1x32xf32, #tpu.memory_space<vmem>>, vector<1x32xf32>
    %52 = arith.mulf %40, %50 : vector<1x32xf32>
    %53 = arith.subf %51, %52 : vector<1x32xf32>
    %54 = tpu.concatenate %50, %53 in 0 : vector<1x32xf32>, vector<1x32xf32> -> vector<2x32xf32>
    %c0_23 = arith.constant 0 : index
    %c0_24 = arith.constant 0 : index
    %55 = vector.load %arg8[%c0_23, %c0_24] : memref<32x128xf32, #tpu.memory_space<vmem>>, vector<32x128xf32>
    %cst_25 = arith.constant dense<0.000000e+00> : vector<2x128xf32>
    %56 = tpu.matmul %54, %55, %cst_25 {dimension_numbers = #tpu.dot_dimension_numbers<[1], [0], [0], [1], [0, 0, 1, 1], [], []>} : vector<2x32xf32>, vector<32x128xf32>, vector<2x128xf32> -> vector<2x128xf32>
    %57 = vector.extract_strided_slice %56 {offsets = [0, 0], sizes = [1, 128], strides = [1, 1]} : vector<2x128xf32> to vector<1x128xf32>
    %58 = vector.broadcast %57 : vector<1x128xf32> to vector<8x128xf32>
    %59 = arith.mulf %25, %58 : vector<8x128xf32>
    %60 = vector.extract_strided_slice %56 {offsets = [1, 0], sizes = [1, 128], strides = [1, 1]} : vector<2x128xf32> to vector<1x128xf32>
    %61 = vector.broadcast %60 : vector<1x128xf32> to vector<8x128xf32>
    %62 = arith.addf %59, %61 : vector<8x128xf32>
    %cst_26 = arith.constant 0.000000e+00 : f32
    %63 = vector.broadcast %cst_26 : f32 to vector<8x128xf32>
    %64 = arith.cmpf ogt, %62, %63 : vector<8x128xf32>
    %cst_27 = arith.constant 0.000000e+00 : f32
    %65 = vector.broadcast %cst_27 : f32 to vector<8x128xf32>
    %66 = arith.minimumf %62, %65 : vector<8x128xf32>
    %67 = math.exp %66 : vector<8x128xf32>
    %cst_28 = arith.constant 1.000000e+00 : f32
    %68 = vector.broadcast %cst_28 : f32 to vector<8x128xf32>
    %69 = arith.subf %67, %68 : vector<8x128xf32>
    %70 = arith.select %64, %62, %69 : vector<8x128xi1>, vector<8x128xf32>
    %71 = arith.truncf %70 : vector<8x128xf32> to vector<8x128xbf16>
    %c0_29 = arith.constant 0 : index
    %c0_30 = arith.constant 0 : index
    %72 = vector.load %arg9[%c0_29, %c0_30] : memref<128x256xbf16, #tpu.memory_space<vmem>>, vector<128x256xbf16>
    %cst_31 = arith.constant dense<0.000000e+00> : vector<8x256xf32>
    %73 = tpu.matmul %71, %72, %cst_31 {dimension_numbers = #tpu.dot_dimension_numbers<[1], [0], [0], [1], [0, 0, 1, 1], [], []>} : vector<8x128xbf16>, vector<128x256xbf16>, vector<8x256xf32> -> vector<8x256xf32>
    %c0_32 = arith.constant 0 : index
    %c0_33 = arith.constant 0 : index
    %74 = vector.load %arg12[%c0_32, %c0_33] : memref<256x16xf32, #tpu.memory_space<vmem>>, vector<256x16xf32>
    %c16_i32 = arith.constant 16 : i32
    %75 = arith.muli %2, %c16_i32 : i32
    %76 = arith.sitofp %75 : i32 to f32
    %77 = vector.broadcast %7 : vector<8x1xf32> to vector<8x256xf32>
    %78 = arith.mulf %73, %77 : vector<8x256xf32>
    %cst_34 = arith.constant dense<0.000000e+00> : vector<256xf32>
    %79 = vector.multi_reduction <add>, %78, %cst_34 [0] : vector<8x256xf32> to vector<256xf32>
    %80 = vector.shape_cast %79 : vector<256xf32> to vector<1x256xf32>
    %81 = arith.mulf %78, %73 : vector<8x256xf32>
    %cst_35 = arith.constant dense<0.000000e+00> : vector<256xf32>
    %82 = vector.multi_reduction <add>, %81, %cst_35 [0] : vector<8x256xf32> to vector<256xf32>
    %83 = vector.shape_cast %82 : vector<256xf32> to vector<1x256xf32>
    %84 = tpu.concatenate %80, %83 in 0 : vector<1x256xf32>, vector<1x256xf32> -> vector<2x256xf32>
    %cst_36 = arith.constant dense<0.000000e+00> : vector<2x16xf32>
    %85 = tpu.matmul %84, %74, %cst_36 {dimension_numbers = #tpu.dot_dimension_numbers<[1], [0], [0], [1], [0, 0, 1, 1], [], []>} : vector<2x256xf32>, vector<256x16xf32>, vector<2x16xf32> -> vector<2x16xf32>
    %86 = vector.broadcast %76 : f32 to vector<2x16xf32>
    %87 = arith.divf %85, %86 : vector<2x16xf32>
    %88 = vector.extract_strided_slice %87 {offsets = [0, 0], sizes = [1, 16], strides = [1, 1]} : vector<2x16xf32> to vector<1x16xf32>
    %89 = vector.extract_strided_slice %87 {offsets = [1, 0], sizes = [1, 16], strides = [1, 1]} : vector<2x16xf32> to vector<1x16xf32>
    %90 = arith.mulf %88, %88 : vector<1x16xf32>
    %91 = arith.subf %89, %90 : vector<1x16xf32>
    %cst_37 = arith.constant 0.000000e+00 : f32
    %92 = vector.broadcast %cst_37 : f32 to vector<1x16xf32>
    %93 = arith.maximumf %91, %92 : vector<1x16xf32>
    %c0_38 = arith.constant 0 : index
    %c0_39 = arith.constant 0 : index
    %94 = vector.load %arg10[%c0_38, %c0_39] : memref<1x16xf32, #tpu.memory_space<vmem>>, vector<1x16xf32>
    %cst_40 = arith.constant 9.99999974E-6 : f32
    %95 = vector.broadcast %cst_40 : f32 to vector<1x16xf32>
    %96 = arith.addf %93, %95 : vector<1x16xf32>
    %97 = math.rsqrt %96 : vector<1x16xf32>
    %98 = arith.mulf %94, %97 : vector<1x16xf32>
    %c0_41 = arith.constant 0 : index
    %c0_42 = arith.constant 0 : index
    %99 = vector.load %arg11[%c0_41, %c0_42] : memref<1x16xf32, #tpu.memory_space<vmem>>, vector<1x16xf32>
    %100 = arith.mulf %88, %98 : vector<1x16xf32>
    %101 = arith.subf %99, %100 : vector<1x16xf32>
    %102 = tpu.concatenate %98, %101 in 0 : vector<1x16xf32>, vector<1x16xf32> -> vector<2x16xf32>
    %c0_43 = arith.constant 0 : index
    %c0_44 = arith.constant 0 : index
    %103 = vector.load %arg13[%c0_43, %c0_44] : memref<16x256xf32, #tpu.memory_space<vmem>>, vector<16x256xf32>
    %cst_45 = arith.constant dense<0.000000e+00> : vector<2x256xf32>
    %104 = tpu.matmul %102, %103, %cst_45 {dimension_numbers = #tpu.dot_dimension_numbers<[1], [0], [0], [1], [0, 0, 1, 1], [], []>} : vector<2x16xf32>, vector<16x256xf32>, vector<2x256xf32> -> vector<2x256xf32>
    %105 = vector.extract_strided_slice %104 {offsets = [0, 0], sizes = [1, 256], strides = [1, 1]} : vector<2x256xf32> to vector<1x256xf32>
    %106 = vector.broadcast %105 : vector<1x256xf32> to vector<8x256xf32>
    %107 = arith.mulf %73, %106 : vector<8x256xf32>
    %108 = vector.extract_strided_slice %104 {offsets = [1, 0], sizes = [1, 256], strides = [1, 1]} : vector<2x256xf32> to vector<1x256xf32>
    %109 = vector.broadcast %108 : vector<1x256xf32> to vector<8x256xf32>
    %110 = arith.addf %107, %109 : vector<8x256xf32>
    %cst_46 = arith.constant 0.000000e+00 : f32
    %111 = vector.broadcast %cst_46 : f32 to vector<8x256xf32>
    %112 = arith.cmpf ogt, %110, %111 : vector<8x256xf32>
    %cst_47 = arith.constant 0.000000e+00 : f32
    %113 = vector.broadcast %cst_47 : f32 to vector<8x256xf32>
    %114 = arith.minimumf %110, %113 : vector<8x256xf32>
    %115 = math.exp %114 : vector<8x256xf32>
    %cst_48 = arith.constant 1.000000e+00 : f32
    %116 = vector.broadcast %cst_48 : f32 to vector<8x256xf32>
    %117 = arith.subf %115, %116 : vector<8x256xf32>
    %118 = arith.select %112, %110, %117 : vector<8x256xi1>, vector<8x256xf32>
    %119 = arith.truncf %118 : vector<8x256xf32> to vector<8x256xbf16>
    %c0_49 = arith.constant 0 : index
    %c0_50 = arith.constant 0 : index
    %120 = vector.load %arg14[%c0_49, %c0_50] : memref<256x512xbf16, #tpu.memory_space<vmem>>, vector<256x512xbf16>
    %cst_51 = arith.constant dense<0.000000e+00> : vector<8x512xf32>
    %121 = tpu.matmul %119, %120, %cst_51 {dimension_numbers = #tpu.dot_dimension_numbers<[1], [0], [0], [1], [0, 0, 1, 1], [], []>} : vector<8x256xbf16>, vector<256x512xbf16>, vector<8x512xf32> -> vector<8x512xf32>
    %c0_52 = arith.constant 0 : index
    %c0_53 = arith.constant 0 : index
    %122 = vector.load %arg17[%c0_52, %c0_53] : memref<512x8xf32, #tpu.memory_space<vmem>>, vector<512x8xf32>
    %c64_i32 = arith.constant 64 : i32
    %123 = arith.muli %2, %c64_i32 : i32
    %124 = arith.sitofp %123 : i32 to f32
    %125 = vector.broadcast %7 : vector<8x1xf32> to vector<8x512xf32>
    %126 = arith.mulf %121, %125 : vector<8x512xf32>
    %cst_54 = arith.constant dense<0.000000e+00> : vector<512xf32>
    %127 = vector.multi_reduction <add>, %126, %cst_54 [0] : vector<8x512xf32> to vector<512xf32>
    %128 = vector.shape_cast %127 : vector<512xf32> to vector<1x512xf32>
    %129 = arith.mulf %126, %121 : vector<8x512xf32>
    %cst_55 = arith.constant dense<0.000000e+00> : vector<512xf32>
    %130 = vector.multi_reduction <add>, %129, %cst_55 [0] : vector<8x512xf32> to vector<512xf32>
    %131 = vector.shape_cast %130 : vector<512xf32> to vector<1x512xf32>
    %132 = tpu.concatenate %128, %131 in 0 : vector<1x512xf32>, vector<1x512xf32> -> vector<2x512xf32>
    %cst_56 = arith.constant dense<0.000000e+00> : vector<2x8xf32>
    %133 = tpu.matmul %132, %122, %cst_56 {dimension_numbers = #tpu.dot_dimension_numbers<[1], [0], [0], [1], [0, 0, 1, 1], [], []>} : vector<2x512xf32>, vector<512x8xf32>, vector<2x8xf32> -> vector<2x8xf32>
    %134 = vector.broadcast %124 : f32 to vector<2x8xf32>
    %135 = arith.divf %133, %134 : vector<2x8xf32>
    %136 = vector.extract_strided_slice %135 {offsets = [0, 0], sizes = [1, 8], strides = [1, 1]} : vector<2x8xf32> to vector<1x8xf32>
    %137 = vector.extract_strided_slice %135 {offsets = [1, 0], sizes = [1, 8], strides = [1, 1]} : vector<2x8xf32> to vector<1x8xf32>
    %138 = arith.mulf %136, %136 : vector<1x8xf32>
    %139 = arith.subf %137, %138 : vector<1x8xf32>
    %cst_57 = arith.constant 0.000000e+00 : f32
    %140 = vector.broadcast %cst_57 : f32 to vector<1x8xf32>
    %141 = arith.maximumf %139, %140 : vector<1x8xf32>
    %c0_58 = arith.constant 0 : index
    %c0_59 = arith.constant 0 : index
    %142 = vector.load %arg15[%c0_58, %c0_59] : memref<1x8xf32, #tpu.memory_space<vmem>>, vector<1x8xf32>
    %cst_60 = arith.constant 9.99999974E-6 : f32
    %143 = vector.broadcast %cst_60 : f32 to vector<1x8xf32>
    %144 = arith.addf %141, %143 : vector<1x8xf32>
    %145 = math.rsqrt %144 : vector<1x8xf32>
    %146 = arith.mulf %142, %145 : vector<1x8xf32>
    %c0_61 = arith.constant 0 : index
    %c0_62 = arith.constant 0 : index
    %147 = vector.load %arg16[%c0_61, %c0_62] : memref<1x8xf32, #tpu.memory_space<vmem>>, vector<1x8xf32>
    %148 = arith.mulf %136, %146 : vector<1x8xf32>
    %149 = arith.subf %147, %148 : vector<1x8xf32>
    %150 = tpu.concatenate %146, %149 in 0 : vector<1x8xf32>, vector<1x8xf32> -> vector<2x8xf32>
    %c0_63 = arith.constant 0 : index
    %c0_64 = arith.constant 0 : index
    %151 = vector.load %arg18[%c0_63, %c0_64] : memref<8x512xf32, #tpu.memory_space<vmem>>, vector<8x512xf32>
    %cst_65 = arith.constant dense<0.000000e+00> : vector<2x512xf32>
    %152 = tpu.matmul %150, %151, %cst_65 {dimension_numbers = #tpu.dot_dimension_numbers<[1], [0], [0], [1], [0, 0, 1, 1], [], []>} : vector<2x8xf32>, vector<8x512xf32>, vector<2x512xf32> -> vector<2x512xf32>
    %153 = vector.extract_strided_slice %152 {offsets = [0, 0], sizes = [1, 512], strides = [1, 1]} : vector<2x512xf32> to vector<1x512xf32>
    %154 = vector.broadcast %153 : vector<1x512xf32> to vector<8x512xf32>
    %155 = arith.mulf %121, %154 : vector<8x512xf32>
    %156 = vector.extract_strided_slice %152 {offsets = [1, 0], sizes = [1, 512], strides = [1, 1]} : vector<2x512xf32> to vector<1x512xf32>
    %157 = vector.broadcast %156 : vector<1x512xf32> to vector<8x512xf32>
    %158 = arith.addf %155, %157 : vector<8x512xf32>
    %cst_66 = arith.constant 0.000000e+00 : f32
    %159 = vector.broadcast %cst_66 : f32 to vector<8x512xf32>
    %160 = arith.cmpf ogt, %158, %159 : vector<8x512xf32>
    %cst_67 = arith.constant 0.000000e+00 : f32
    %161 = vector.broadcast %cst_67 : f32 to vector<8x512xf32>
    %162 = arith.minimumf %158, %161 : vector<8x512xf32>
    %163 = math.exp %162 : vector<8x512xf32>
    %cst_68 = arith.constant 1.000000e+00 : f32
    %164 = vector.broadcast %cst_68 : f32 to vector<8x512xf32>
    %165 = arith.subf %163, %164 : vector<8x512xf32>
    %166 = arith.select %160, %158, %165 : vector<8x512xi1>, vector<8x512xf32>
    %167 = arith.truncf %166 : vector<8x512xf32> to vector<8x512xbf16>
    %c0_69 = arith.constant 0 : index
    %c0_70 = arith.constant 0 : index
    %168 = vector.load %arg19[%c0_69, %c0_70] : memref<512x256xbf16, #tpu.memory_space<vmem>>, vector<512x256xbf16>
    %cst_71 = arith.constant dense<0.000000e+00> : vector<8x256xf32>
    %169 = tpu.matmul %167, %168, %cst_71 {dimension_numbers = #tpu.dot_dimension_numbers<[1], [0], [0], [1], [0, 0, 1, 1], [], []>} : vector<8x512xbf16>, vector<512x256xbf16>, vector<8x256xf32> -> vector<8x256xf32>
    %c0_72 = arith.constant 0 : index
    %c0_73 = arith.constant 0 : index
    %170 = vector.load %arg20[%c0_72, %c0_73] : memref<1x256xf32, #tpu.memory_space<vmem>>, vector<1x256xf32>
    %171 = vector.broadcast %170 : vector<1x256xf32> to vector<8x256xf32>
    %172 = arith.addf %169, %171 : vector<8x256xf32>
    %c0_74 = arith.constant 0 : index
    %c0_75 = arith.constant 0 : index
    %173 = vector.load %arg21[%c0_74, %c0_75] : memref<8x256xf32, #tpu.memory_space<vmem>>, vector<8x256xf32>
    tpu.vector_store %arg21[%c0_74, %c0_75], %172 {strides = array<i32>} : memref<8x256xf32, #tpu.memory_space<vmem>>, vector<8x256xf32>,
    return
  }
  func.func @transform_0(%arg0: i32) -> (i32, i32) {
    %c0_i32 = arith.constant 0 : i32
    %c0_i32_0 = arith.constant 0 : i32
    return %arg0, %c0_i32 : i32, i32
  }
  func.func @transform_1(%arg0: i32) -> (i32, i32) {
    %c0_i32 = arith.constant 0 : i32
    %c0_i32_0 = arith.constant 0 : i32
    %c0_i32_1 = arith.constant 0 : i32
    return %c0_i32, %c0_i32_0 : i32, i32
  }
  func.func @transform_2(%arg0: i32) -> (i32, i32) {
    %c0_i32 = arith.constant 0 : i32
    %c0_i32_0 = arith.constant 0 : i32
    %c0_i32_1 = arith.constant 0 : i32
    return %c0_i32, %c0_i32_0 : i32, i32
  }
  func.func @transform_3(%arg0: i32) -> (i32, i32) {
    %c0_i32 = arith.constant 0 : i32
    %c0_i32_0 = arith.constant 0 : i32
    %c0_i32_1 = arith.constant 0 : i32
    return %c0_i32, %c0_i32_0 : i32, i32
  }
  func.func @transform_4(%arg0: i32) -> (i32, i32) {
    %c0_i32 = arith.constant 0 : i32
    %c0_i32_0 = arith.constant 0 : i32
    %c0_i32_1 = arith.constant 0 : i32
    return %c0_i32, %c0_i32_0 : i32, i32
  }
  func.func @transform_5(%arg0: i32) -> (i32, i32) {
    %c0_i32 = arith.constant 0 : i32
    %c0_i32_0 = arith.constant 0 : i32
    %c0_i32_1 = arith.constant 0 : i32
    return %c0_i32, %c0_i32_0 : i32, i32
  }
  func.func @transform_6(%arg0: i32) -> (i32, i32) {
    %c0_i32 = arith.constant 0 : i32
    %c0_i32_0 = arith.constant 0 : i32
    %c0_i32_1 = arith.constant 0 : i32
    return %c0_i32, %c0_i32_0 : i32, i32
  }
  func.func @transform_7(%arg0: i32) -> (i32, i32) {
    %c0_i32 = arith.constant 0 : i32
    %c0_i32_0 = arith.constant 0 : i32
    %c0_i32_1 = arith.constant 0 : i32
    return %c0_i32, %c0_i32_0 : i32, i32
  }
  func.func @transform_8(%arg0: i32) -> (i32, i32) {
    %c0_i32 = arith.constant 0 : i32
    %c0_i32_0 = arith.constant 0 : i32
    %c0_i32_1 = arith.constant 0 : i32
    return %c0_i32, %c0_i32_0 : i32, i32
  }
  func.func @transform_9(%arg0: i32) -> (i32, i32) {
    %c0_i32 = arith.constant 0 : i32
    %c0_i32_0 = arith.constant 0 : i32
    %c0_i32_1 = arith.constant 0 : i32
    return %c0_i32, %c0_i32_0 : i32, i32
  }
  func.func @transform_10(%arg0: i32) -> (i32, i32) {
    %c0_i32 = arith.constant 0 : i32
    %c0_i32_0 = arith.constant 0 : i32
    %c0_i32_1 = arith.constant 0 : i32
    return %c0_i32, %c0_i32_0 : i32, i32
  }
  func.func @transform_11(%arg0: i32) -> (i32, i32) {
    %c0_i32 = arith.constant 0 : i32
    %c0_i32_0 = arith.constant 0 : i32
    %c0_i32_1 = arith.constant 0 : i32
    return %c0_i32, %c0_i32_0 : i32, i32
  }
  func.func @transform_12(%arg0: i32) -> (i32, i32) {
    %c0_i32 = arith.constant 0 : i32
    %c0_i32_0 = arith.constant 0 : i32
    %c0_i32_1 = arith.constant 0 : i32
    return %c0_i32, %c0_i32_0 : i32, i32
  }
  func.func @transform_13(%arg0: i32) -> (i32, i32) {
    %c0_i32 = arith.constant 0 : i32
    %c0_i32_0 = arith.constant 0 : i32
    %c0_i32_1 = arith.constant 0 : i32
    return %c0_i32, %c0_i32_0 : i32, i32
  }
  func.func @transform_14(%arg0: i32) -> (i32, i32) {
    %c0_i32 = arith.constant 0 : i32
    %c0_i32_0 = arith.constant 0 : i32
    %c0_i32_1 = arith.constant 0 : i32
    return %c0_i32, %c0_i32_0 : i32, i32
  }
  func.func @transform_15(%arg0: i32) -> (i32, i32) {
    %c0_i32 = arith.constant 0 : i32
    %c0_i32_0 = arith.constant 0 : i32
    %c0_i32_1 = arith.constant 0 : i32
    return %c0_i32, %c0_i32_0 : i32, i32
  }
  func.func @transform_16(%arg0: i32) -> (i32, i32) {
    %c0_i32 = arith.constant 0 : i32
    %c0_i32_0 = arith.constant 0 : i32
    %c0_i32_1 = arith.constant 0 : i32
    return %c0_i32, %c0_i32_0 : i32, i32
  }
  func.func @transform_17(%arg0: i32) -> (i32, i32) {
    %c0_i32 = arith.constant 0 : i32
    %c0_i32_0 = arith.constant 0 : i32
    %c0_i32_1 = arith.constant 0 : i32
    return %c0_i32, %c0_i32_0 : i32, i32
  }
  func.func @transform_18(%arg0: i32) -> (i32, i32) {
    %c0_i32 = arith.constant 0 : i32
    %c0_i32_0 = arith.constant 0 : i32
    %c0_i32_1 = arith.constant 0 : i32
    return %c0_i32, %c0_i32_0 : i32, i32
  }
  func.func @transform_19(%arg0: i32) -> (i32, i32) {
    %c0_i32 = arith.constant 0 : i32
    %c0_i32_0 = arith.constant 0 : i32
    %c0_i32_1 = arith.constant 0 : i32
    return %c0_i32, %c0_i32_0 : i32, i32
  }
  func.func @transform_20(%arg0: i32) -> (i32, i32) {
    %c0_i32 = arith.constant 0 : i32
    %c0_i32_0 = arith.constant 0 : i32
    return %arg0, %c0_i32 : i32, i32
  }
}

</mosaic_0001>

<llo_original>
// kernel: cnn_decoder_forward.1
$region0: #{cnn_decoder_forward.1}
  #allocation0 [shape = 'u32[]', space=smem, size = 0x4, offset = 0x4, fixed_abs, tag = 'smem constant byte address 0x4 - core index']
  #allocation1 [shape = 'u32[144,128]{1,0:T(1,128)}', space=vmem, size = 0x12000, scoped, tag = 'internal scratch']
  %s0 = inlined_call_operand.vmem [shape: f32[8,16], index: 0, kind: input, shape index: {}]
  %s1 = inlined_call_operand.hbm [shape: bf16[16,64], index: 1, kind: input, shape index: {}]
  %s2 = inlined_call_operand.vmem [shape: f32[1,64], index: 2, kind: input, shape index: {}]
  %s3 = inlined_call_operand.hbm [shape: bf16[64,128], index: 3, kind: input, shape index: {}]
  %s4 = inlined_call_operand.hbm [shape: f32[1,32], index: 4, kind: input, shape index: {}]
  %s5 = inlined_call_operand.hbm [shape: f32[1,32], index: 5, kind: input, shape index: {}]
  %s6 = inlined_call_operand.vmem [shape: f32[128,32], index: 6, kind: input, shape index: {}]
  %s7 = inlined_call_operand.hbm [shape: f32[32,128], index: 7, kind: input, shape index: {}]
  %s8 = inlined_call_operand.hbm [shape: bf16[128,256], index: 8, kind: input, shape index: {}]
  %s9 = inlined_call_operand.vmem [shape: f32[1,16], index: 9, kind: input, shape index: {}]
  %s10 = inlined_call_operand.vmem [shape: f32[1,16], index: 10, kind: input, shape index: {}]
  %s11 = inlined_call_operand.vmem [shape: f32[256,16], index: 11, kind: input, shape index: {}]
  %s12 = inlined_call_operand.hbm [shape: f32[16,256], index: 12, kind: input, shape index: {}]
  %s13 = inlined_call_operand.vmem [shape: bf16[256,512], index: 13, kind: input, shape index: {}]
  %s14 = inlined_call_operand.vmem [shape: f32[1,8], index: 14, kind: input, shape index: {}]
  %s15 = inlined_call_operand.vmem [shape: f32[1,8], index: 15, kind: input, shape index: {}]
  %s16 = inlined_call_operand.vmem [shape: f32[512,8], index: 16, kind: input, shape index: {}]
  %s17 = inlined_call_operand.hbm [shape: f32[8,512], index: 17, kind: input, shape index: {}]
  %s18 = inlined_call_operand.vmem [shape: bf16[512,256], index: 18, kind: input, shape index: {}]
  %s19 = inlined_call_operand.vmem [shape: f32[1,256], index: 19, kind: input, shape index: {}]
  %s20 = inlined_call_operand.vmem [shape: f32[8,256], index: 20, kind: output, shape index: {}]
  %s21 = sld [smem:[#allocation0]]
  $region122: #{cnn_decoder_forward.1} parent=0
    _
  %s23 = ssub.s32 1, %s21
  %s24 = scalar_select 0, %s23, %s21
  $region1: #{cnn_decoder_forward.1} parent=0
    #allocation2 [shape = 'u8[4096]{0}', space=vmem, size = 0x1000, scoped, tag = 'input window, operand 1, single buffered']
    #allocation3 [shape = 's32[1]{0}', space=sflag, size = 0x4, scoped, tag = 'scoped memory for cnn_decoder_forward.1']
    #allocation4 [shape = 'u8[16384]{0}', space=vmem, size = 0x4000, scoped, tag = 'input window, operand 3, single buffered']
    #allocation5 [shape = 's32[1]{0}', space=sflag, size = 0x4, scoped, tag = 'scoped memory for cnn_decoder_forward.1']
    #allocation6 [shape = 'u8[512]{0}', space=vmem, size = 0x400, scoped, tag = 'input window, operand 4, single buffered']
    #allocation7 [shape = 'u8[512]{0}', space=vmem, size = 0x400, scoped, tag = 'input window, operand 5, single buffered']
    #allocation8 [shape = 's32[1]{0}', space=sflag, size = 0x4, scoped, tag = 'scoped memory for cnn_decoder_forward.1']
    #allocation9 [shape = 'u8[16384]{0}', space=vmem, size = 0x4000, scoped, tag = 'input window, operand 7, single buffered']
    #allocation10 [shape = 'u8[65536]{0}', space=vmem, size = 0x10000, scoped, tag = 'input window, operand 8, single buffered']
    #allocation11 [shape = 's32[1]{0}', space=sflag, size = 0x4, scoped, tag = 'scoped memory for cnn_decoder_forward.1']
    #allocation12 [shape = 'u8[16384]{0}', space=vmem, size = 0x4000, scoped, tag = 'input window, operand 12, single buffered']
    #allocation13 [shape = 'u8[16384]{0}', space=vmem, size = 0x4000, scoped, tag = 'input window, operand 17, single buffered']
    #allocation14 [shape = 's32[1]{0}', space=sflag, size = 0x4, scoped, tag = 'scoped memory for cnn_decoder_forward.1']
    %25 = vsyncpa [#allocation3], 0
    %26 = vsyncpa [#allocation5], 0
    %27 = vsyncpa [#allocation8], 0
    %28 = vsyncpa [#allocation11], 0
    %29 = vsyncpa [#allocation14], 0
    // Predicated region
    $region2: #{cnn_decoder_forward.1} parent=1 // pred_check
      _
    $region3: #{cnn_decoder_forward.1} parent=1 // pred_check_branch
      %31 = sbr.rel (0) target = $region5
    $region4: #{cnn_decoder_forward.1} parent=1 // pred_region
      _
    $region5: #{cnn_decoder_forward.1} parent=1 // pred_fallthru
      _
    // Predicated region
    $region6: #{cnn_decoder_forward.1} parent=1 // pred_check
      _
    $region7: #{cnn_decoder_forward.1} parent=1 // pred_check_branch
      %33 = sbr.rel (0) target = $region9
    $region8: #{cnn_decoder_forward.1} parent=1 // pred_region
      %s35 = ssub.s32 128, 128
      %36 = vsyncadd [#allocation3], %s35
      %s37 = sshll.u32 [#allocation2], 4
      %s38 = int_to_ptr.vmem [resolvable:$true] %s37
      %43 = dma.hbm_to_vmem [thread:$0]  %s1, 128, %s38, [#allocation3], 64, 64, 4
    $region9: #{cnn_decoder_forward.1} parent=1 // pred_fallthru
      _
    // Predicated region
    $region10: #{cnn_decoder_forward.1} parent=1 // pred_check
      _
    $region11: #{cnn_decoder_forward.1} parent=1 // pred_check_branch
      %45 = sbr.rel (0) target = $region13
    $region12: #{cnn_decoder_forward.1} parent=1 // pred_region
      _
    $region13: #{cnn_decoder_forward.1} parent=1 // pred_fallthru
      _
    // Predicated region
    $region14: #{cnn_decoder_forward.1} parent=1 // pred_check
      _
    $region15: #{cnn_decoder_forward.1} parent=1 // pred_check_branch
      %47 = sbr.rel (0) target = $region17
    $region16: #{cnn_decoder_forward.1} parent=1 // pred_region
      %s49 = ssub.s32 512, 512
      %50 = vsyncadd [#allocation5], %s49
      %s51 = sshll.u32 [#allocation4], 4
      %s52 = int_to_ptr.vmem [resolvable:$true] %s51
      %57 = dma.hbm_to_vmem [thread:$0]  %s3, 512, %s52, [#allocation5], 64, 64, 4
    $region17: #{cnn_decoder_forward.1} parent=1 // pred_fallthru
      _
    // Predicated region
    $region18: #{cnn_decoder_forward.1} parent=1 // pred_check
      _
    $region19: #{cnn_decoder_forward.1} parent=1 // pred_check_branch
      %59 = sbr.rel (0) target = $region21
    $region20: #{cnn_decoder_forward.1} parent=1 // pred_region
      %s61 = ssub.s32 16, 16
      %62 = vsyncadd [#allocation5], %s61
      %s64 = sshll.u32 [#allocation6], 4
      %s65 = int_to_ptr.vmem [resolvable:$true] %s64
      %67 = dma.hbm_to_vmem [thread:$0]  %s4, 16, %s65, [#allocation5]
    $region21: #{cnn_decoder_forward.1} parent=1 // pred_fallthru
      _
    // Predicated region
    $region22: #{cnn_decoder_forward.1} parent=1 // pred_check
      _
    $region23: #{cnn_decoder_forward.1} parent=1 // pred_check_branch
      %69 = sbr.rel (0) target = $region25
    $region24: #{cnn_decoder_forward.1} parent=1 // pred_region
      %s71 = ssub.s32 16, 16
      %72 = vsyncadd [#allocation8], %s71
      %s74 = sshll.u32 [#allocation7], 4
      %s75 = int_to_ptr.vmem [resolvable:$true] %s74
      %77 = dma.hbm_to_vmem [thread:$0]  %s5, 16, %s75, [#allocation8]
    $region25: #{cnn_decoder_forward.1} parent=1 // pred_fallthru
      _
    // Predicated region
    $region26: #{cnn_decoder_forward.1} parent=1 // pred_check
      _
    $region27: #{cnn_decoder_forward.1} parent=1 // pred_check_branch
      %79 = sbr.rel (0) target = $region29
    $region28: #{cnn_decoder_forward.1} parent=1 // pred_region
      _
    $region29: #{cnn_decoder_forward.1} parent=1 // pred_fallthru
      _
    // Predicated region
    $region30: #{cnn_decoder_forward.1} parent=1 // pred_check
      _
    $region31: #{cnn_decoder_forward.1} parent=1 // pred_check_branch
      %81 = sbr.rel (0) target = $region33
    $region32: #{cnn_decoder_forward.1} parent=1 // pred_region
      %s83 = ssub.s32 512, 512
      %84 = vsyncadd [#allocation8], %s83
      %s85 = sshll.u32 [#allocation9], 4
      %s86 = int_to_ptr.vmem [resolvable:$true] %s85
      %91 = dma.hbm_to_vmem [thread:$0]  %s7, 512, %s86, [#allocation8], 128, 128, 8
    $region33: #{cnn_decoder_forward.1} parent=1 // pred_fallthru
      _
    // Predicated region
    $region34: #{cnn_decoder_forward.1} parent=1 // pred_check
      _
    $region35: #{cnn_decoder_forward.1} parent=1 // pred_check_branch
      %93 = sbr.rel (0) target = $region37
    $region36: #{cnn_decoder_forward.1} parent=1 // pred_region
      %s95 = ssub.s32 2048, 2048
      %96 = vsyncadd [#allocation11], %s95
      %s97 = sshll.u32 [#allocation10], 4
      %s98 = int_to_ptr.vmem [resolvable:$true] %s97
      %103 = dma.hbm_to_vmem [thread:$0]  %s8, 2048, %s98, [#allocation11], 128, 128, 8
    $region37: #{cnn_decoder_forward.1} parent=1 // pred_fallthru
      _
    // Predicated region
    $region38: #{cnn_decoder_forward.1} parent=1 // pred_check
      _
    $region39: #{cnn_decoder_forward.1} parent=1 // pred_check_branch
      %105 = sbr.rel (0) target = $region41
    $region40: #{cnn_decoder_forward.1} parent=1 // pred_region
      _
    $region41: #{cnn_decoder_forward.1} parent=1 // pred_fallthru
      _
    // Predicated region
    $region42: #{cnn_decoder_forward.1} parent=1 // pred_check
      _
    $region43: #{cnn_decoder_forward.1} parent=1 // pred_check_branch
      %107 = sbr.rel (0) target = $region45
    $region44: #{cnn_decoder_forward.1} parent=1 // pred_region
      _
    $region45: #{cnn_decoder_forward.1} parent=1 // pred_fallthru
      _
    // Predicated region
    $region46: #{cnn_decoder_forward.1} parent=1 // pred_check
      _
    $region47: #{cnn_decoder_forward.1} parent=1 // pred_check_branch
      %109 = sbr.rel (0) target = $region49
    $region48: #{cnn_decoder_forward.1} parent=1 // pred_region
      _
    $region49: #{cnn_decoder_forward.1} parent=1 // pred_fallthru
      _
    // Predicated region
    $region50: #{cnn_decoder_forward.1} parent=1 // pred_check
      _
    $region51: #{cnn_decoder_forward.1} parent=1 // pred_check_branch
      %111 = sbr.rel (0) target = $region53
    $region52: #{cnn_decoder_forward.1} parent=1 // pred_region
      %s113 = ssub.s32 512, 512
      %114 = vsyncadd [#allocation11], %s113
      %s115 = sshll.u32 [#allocation12], 4
      %s116 = int_to_ptr.vmem [resolvable:$true] %s115
      %121 = dma.hbm_to_vmem [thread:$0]  %s12, 512, %s116, [#allocation11], 256, 256, 16
    $region53: #{cnn_decoder_forward.1} parent=1 // pred_fallthru
      _
    // Predicated region
    $region54: #{cnn_decoder_forward.1} parent=1 // pred_check
      _
    $region55: #{cnn_decoder_forward.1} parent=1 // pred_check_branch
      %123 = sbr.rel (0) target = $region57
    $region56: #{cnn_decoder_forward.1} parent=1 // pred_region
      _
    $region57: #{cnn_decoder_forward.1} parent=1 // pred_fallthru
      _
    // Predicated region
    $region58: #{cnn_decoder_forward.1} parent=1 // pred_check
      _
    $region59: #{cnn_decoder_forward.1} parent=1 // pred_check_branch
      %125 = sbr.rel (0) target = $region61
    $region60: #{cnn_decoder_forward.1} parent=1 // pred_region
      _
    $region61: #{cnn_decoder_forward.1} parent=1 // pred_fallthru
      _
    // Predicated region
    $region62: #{cnn_decoder_forward.1} parent=1 // pred_check
      _
    $region63: #{cnn_decoder_forward.1} parent=1 // pred_check_branch
      %127 = sbr.rel (0) target = $region65
    $region64: #{cnn_decoder_forward.1} parent=1 // pred_region
      _
    $region65: #{cnn_decoder_forward.1} parent=1 // pred_fallthru
      _
    // Predicated region
    $region66: #{cnn_decoder_forward.1} parent=1 // pred_check
      _
    $region67: #{cnn_decoder_forward.1} parent=1 // pred_check_branch
      %129 = sbr.rel (0) target = $region69
    $region68: #{cnn_decoder_forward.1} parent=1 // pred_region
      _
    $region69: #{cnn_decoder_forward.1} parent=1 // pred_fallthru
      _
    // Predicated region
    $region70: #{cnn_decoder_forward.1} parent=1 // pred_check
      _
    $region71: #{cnn_decoder_forward.1} parent=1 // pred_check_branch
      %131 = sbr.rel (0) target = $region73
    $region72: #{cnn_decoder_forward.1} parent=1 // pred_region
      %s133 = ssub.s32 512, 512
      %134 = vsyncadd [#allocation14], %s133
      %s136 = sshll.u32 [#allocation13], 4
      %s137 = int_to_ptr.vmem [resolvable:$true] %s136
      %139 = dma.hbm_to_vmem [thread:$0]  %s17, 512, %s137, [#allocation14]
    $region73: #{cnn_decoder_forward.1} parent=1 // pred_fallthru
      _
    // Predicated region
    $region74: #{cnn_decoder_forward.1} parent=1 // pred_check
      _
    $region75: #{cnn_decoder_forward.1} parent=1 // pred_check_branch
      %141 = sbr.rel (0) target = $region77
    $region76: #{cnn_decoder_forward.1} parent=1 // pred_region
      _
    $region77: #{cnn_decoder_forward.1} parent=1 // pred_fallthru
      _
    // Predicated region
    $region78: #{cnn_decoder_forward.1} parent=1 // pred_check
      _
    $region79: #{cnn_decoder_forward.1} parent=1 // pred_check_branch
      %143 = sbr.rel (0) target = $region81
    $region80: #{cnn_decoder_forward.1} parent=1 // pred_region
      _
    $region81: #{cnn_decoder_forward.1} parent=1 // pred_fallthru
      _
    // Predicated region
    $region82: #{cnn_decoder_forward.1} parent=1 // pred_check
      _
    $region83: #{cnn_decoder_forward.1} parent=1 // pred_check_branch
      %145 = sbr.rel (0) target = $region85
    $region84: #{cnn_decoder_forward.1} parent=1 // pred_region
      %146 = dma.done [#allocation3], 128
    $region85: #{cnn_decoder_forward.1} parent=1 // pred_fallthru
      _
    // Predicated region
    $region86: #{cnn_decoder_forward.1} parent=1 // pred_check
      _
    $region87: #{cnn_decoder_forward.1} parent=1 // pred_check_branch
      %148 = sbr.rel (0) target = $region89
    $region88: #{cnn_decoder_forward.1} parent=1 // pred_region
      %149 = dma.done [#allocation5], 512
    $region89: #{cnn_decoder_forward.1} parent=1 // pred_fallthru
      _
    // Predicated region
    $region90: #{cnn_decoder_forward.1} parent=1 // pred_check
      _
    $region91: #{cnn_decoder_forward.1} parent=1 // pred_check_branch
      %151 = sbr.rel (0) target = $region93
    $region92: #{cnn_decoder_forward.1} parent=1 // pred_region
      %152 = dma.done [#allocation5], 16
    $region93: #{cnn_decoder_forward.1} parent=1 // pred_fallthru
      _
    // Predicated region
    $region94: #{cnn_decoder_forward.1} parent=1 // pred_check
      _
    $region95: #{cnn_decoder_forward.1} parent=1 // pred_check_branch
      %154 = sbr.rel (0) target = $region97
    $region96: #{cnn_decoder_forward.1} parent=1 // pred_region
      %155 = dma.done [#allocation8], 16
    $region97: #{cnn_decoder_forward.1} parent=1 // pred_fallthru
      _
    // Predicated region
    $region98: #{cnn_decoder_forward.1} parent=1 // pred_check
      _
    $region99: #{cnn_decoder_forward.1} parent=1 // pred_check_branch
      %157 = sbr.rel (0) target = $region101
    $region100: #{cnn_decoder_forward.1} parent=1 // pred_region
      %158 = dma.done [#allocation8], 512
    $region101: #{cnn_decoder_forward.1} parent=1 // pred_fallthru
      _
    // Predicated region
    $region102: #{cnn_decoder_forward.1} parent=1 // pred_check
      _
    $region103: #{cnn_decoder_forward.1} parent=1 // pred_check_branch
      %160 = sbr.rel (0) target = $region105
    $region104: #{cnn_decoder_forward.1} parent=1 // pred_region
      %161 = dma.done [#allocation11], 2048
    $region105: #{cnn_decoder_forward.1} parent=1 // pred_fallthru
      _
    // Predicated region
    $region106: #{cnn_decoder_forward.1} parent=1 // pred_check
      _
    $region107: #{cnn_decoder_forward.1} parent=1 // pred_check_branch
      %163 = sbr.rel (0) target = $region109
    $region108: #{cnn_decoder_forward.1} parent=1 // pred_region
      %164 = dma.done [#allocation11], 512
    $region109: #{cnn_decoder_forward.1} parent=1 // pred_fallthru
      _
    // Predicated region
    $region110: #{cnn_decoder_forward.1} parent=1 // pred_check
      _
    $region111: #{cnn_decoder_forward.1} parent=1 // pred_check_branch
      %166 = sbr.rel (0) target = $region113
    $region112: #{cnn_decoder_forward.1} parent=1 // pred_region
      %167 = dma.done [#allocation14], 512
    $region113: #{cnn_decoder_forward.1} parent=1 // pred_fallthru
      _
    %s169 = smul.u32 0, 8
    %s170 = ssub.s32 2, %s169
    %p171 = scmp.lt.s32.totalorder %s170, 8
    %s172 = scalar_select %p171, %s170, 8
    %v173 = vlaneseq
    %v174 = vshrl.u32 %v173, 7
    %v175 = vstv %s172
    %vm176 = vcmp.lt.s32.totalorder %v174, %v175
    %v177 = vsel %vm176, 1, 0
    %v178 = vcvt.s32.f32 %v177
    %v179 = vld [vmem:[%s0] sm:$0xff]
    %v180 = vpack.c.bf16 %v179, %v179
    %v181 = vld [vmem:[#allocation2] sm:$0xf]
    %v182 = vld [vmem:[#allocation2 + $0x4] sm:$0xf]
    %v183 = vld [vmem:[%s2] sm:$0x1]
    %v185 = vlaneseq
    %v186 = vshrl.u32 %v185, 7
    %v187 = vsub.s32 0, %v186
    %v188 = vrot.slane %v183, %v187
    %v192 = vunpack.c.l.b16 %v181
    %v193 = vunpack.c.l.b16 %v182
    %v194 = vpack.c.b16 %v193, %v192
    %vm196 = vcmask 130048
    %v198 = vsel %vm196, %v180, 0
    %200 = vmatprep.subr.bf16.mxu0 0
    %201 = vmatpush1.bf16.msra.mxu0 %v194
    %202 = vmatprep.subr.bf16.mxu0 0
    %203 = vmatpush1.bf16.msra.mxu0 0
    %204 = vmatprep.subr.bf16.mxu0 0
    %205 = vmatpush1.bf16.msra.mxu0 0
    %206 = vmatprep.subr.bf16.mxu0 0
    %207 = vmatpush1.bf16.msra.mxu0 0
    %208 = vmatprep.subr.bf16.mxu0 0
    %209 = vmatpush1.bf16.msra.mxu0 0
    %210 = vmatprep.subr.bf16.mxu0 0
    %211 = vmatpush1.bf16.msra.mxu0 0
    %212 = vmatprep.subr.bf16.mxu0 0
    %213 = vmatpush1.bf16.msra.mxu0 0
    %214 = vmatprep.subr.bf16.mxu0 0
    %215 = vmatpush1.bf16.msra.mxu0 0
    %216 = vmatprep.subr.bf16.mxu0 0
    %217 = vmatpush1.bf16.msra.mxu0 0
    %218 = vmatprep.subr.bf16.mxu0 0
    %219 = vmatpush1.bf16.msra.mxu0 0
    %220 = vmatprep.subr.bf16.mxu0 0
    %221 = vmatpush1.bf16.msra.mxu0 0
    %222 = vmatprep.subr.bf16.mxu0 0
    %223 = vmatpush1.bf16.msra.mxu0 0
    %224 = vmatprep.subr.bf16.mxu0 0
    %225 = vmatpush1.bf16.msra.mxu0 0
    %226 = vmatprep.subr.bf16.mxu0 0
    %227 = vmatpush1.bf16.msra.mxu0 0
    %228 = vmatprep.subr.bf16.mxu0 0
    %229 = vmatpush1.bf16.msra.mxu0 0
    %230 = vmatprep.subr.bf16.mxu0 0
    %231 = vmatpush1.bf16.msra.mxu0 0
    %232 = vmatprep.mubr.bf16.mxu0 0
    %233 = vmatmul.mubr.bf16.gmra.mrb[0].mxu0 %v198
    %v234 = vpop.f32.mrb[0].mxu0
    %v235 = vadd.f32 %v188, %v234
    %v236 = vpop.f32.mrb[0].mxu0
    %v237 = vpop.f32.mrb[0].mxu0
    %v238 = vpop.f32.mrb[0].mxu0
    %239 = vdwg.mxu0
    %vm240 = vcmp.gt.f32.partialorder %v235, 0.0
    %v241 = vmin.f32 %v235, 0.0
    %v242 = vmul.f32 %v241, 1.442695
    %v243 = vpow.pop %v242
    %v244 = vsub.f32 %v243, 1.0
    %v245 = vsel %vm240, %v235, %v244
    %v246 = vpack.c.bf16 %v245, %v245
    %v247 = vld [vmem:[#allocation4] sm:$0xf]
    %v248 = vld [vmem:[#allocation4 + $0x4] sm:$0xf]
    %v249 = vld [vmem:[#allocation4 + $0x8] sm:$0xf]
    %v250 = vld [vmem:[#allocation4 + $0xc] sm:$0xf]
    %v251 = vld [vmem:[#allocation4 + $0x10] sm:$0xf]
    %v252 = vld [vmem:[#allocation4 + $0x14] sm:$0xf]
    %v253 = vld [vmem:[#allocation4 + $0x18] sm:$0xf]
    %v254 = vld [vmem:[#allocation4 + $0x1c] sm:$0xf]
    %v263 = vunpack.c.l.b16 %v247
    %v264 = vunpack.c.l.b16 %v248
    %v265 = vunpack.c.l.b16 %v249
    %v266 = vunpack.c.l.b16 %v250
    %v267 = vunpack.c.l.b16 %v251
    %v268 = vunpack.c.l.b16 %v252
    %v269 = vunpack.c.l.b16 %v253
    %v270 = vunpack.c.l.b16 %v254
    %v271 = vpack.c.b16 %v264, %v263
    %v272 = vpack.c.b16 %v266, %v265
    %v273 = vpack.c.b16 %v268, %v267
    %v274 = vpack.c.b16 %v270, %v269
    %vm279 = vcmask 523264
    %v281 = vsel %vm279, %v246, 0
    %283 = vmatprep.subr.bf16.mxu0 0
    %284 = vmatpush1.bf16.msra.mxu0 %v271
    %285 = vmatprep.subr.bf16.mxu0 0
    %286 = vmatpush1.bf16.msra.mxu0 %v272
    %287 = vmatprep.subr.bf16.mxu0 0
    %288 = vmatpush1.bf16.msra.mxu0 %v273
    %289 = vmatprep.subr.bf16.mxu0 0
    %290 = vmatpush1.bf16.msra.mxu0 %v274
    %291 = vmatprep.subr.bf16.mxu0 0
    %292 = vmatpush1.bf16.msra.mxu0 0
    %293 = vmatprep.subr.bf16.mxu0 0
    %294 = vmatpush1.bf16.msra.mxu0 0
    %295 = vmatprep.subr.bf16.mxu0 0
    %296 = vmatpush1.bf16.msra.mxu0 0
    %297 = vmatprep.subr.bf16.mxu0 0
    %298 = vmatpush1.bf16.msra.mxu0 0
    %299 = vmatprep.subr.bf16.mxu0 0
    %300 = vmatpush1.bf16.msra.mxu0 0
    %301 = vmatprep.subr.bf16.mxu0 0
    %302 = vmatpush1.bf16.msra.mxu0 0
    %303 = vmatprep.subr.bf16.mxu0 0
    %304 = vmatpush1.bf16.msra.mxu0 0
    %305 = vmatprep.subr.bf16.mxu0 0
    %306 = vmatpush1.bf16.msra.mxu0 0
    %307 = vmatprep.subr.bf16.mxu0 0
    %308 = vmatpush1.bf16.msra.mxu0 0
    %309 = vmatprep.subr.bf16.mxu0 0
    %310 = vmatpush1.bf16.msra.mxu0 0
    %311 = vmatprep.subr.bf16.mxu0 0
    %312 = vmatpush1.bf16.msra.mxu0 0
    %313 = vmatprep.subr.bf16.mxu0 0
    %314 = vmatpush1.bf16.msra.mxu0 0
    %315 = vmatprep.mubr.bf16.mxu0 0
    %316 = vmatmul.mubr.bf16.gmra.mrb[0].mxu0 %v281
    %v317 = vpop.f32.mrb[0].mxu0
    %v318 = vadd.f32 0.0, %v317
    %v319 = vpop.f32.mrb[0].mxu0
    %v320 = vpop.f32.mrb[0].mxu0
    %v321 = vpop.f32.mrb[0].mxu0
    %322 = vdwg.mxu0
    %v323 = vld [vmem:[%s6] sm:$0xff]
    %v324 = vld [vmem:[%s6 + $0x8] sm:$0xff]
    %v325 = vld [vmem:[%s6 + $0x10] sm:$0xff]
    %v326 = vld [vmem:[%s6 + $0x18] sm:$0xff]
    %v327 = vld [vmem:[%s6 + $0x20] sm:$0xff]
    %v328 = vld [vmem:[%s6 + $0x28] sm:$0xff]
    %v329 = vld [vmem:[%s6 + $0x30] sm:$0xff]
    %v330 = vld [vmem:[%s6 + $0x38] sm:$0xff]
    %v331 = vld [vmem:[%s6 + $0x40] sm:$0xff]
    %v332 = vld [vmem:[%s6 + $0x48] sm:$0xff]
    %v333 = vld [vmem:[%s6 + $0x50] sm:$0xff]
    %v334 = vld [vmem:[%s6 + $0x58] sm:$0xff]
    %v335 = vld [vmem:[%s6 + $0x60] sm:$0xff]
    %v336 = vld [vmem:[%s6 + $0x68] sm:$0xff]
    %v337 = vld [vmem:[%s6 + $0x70] sm:$0xff]
    %v338 = vld [vmem:[%s6 + $0x78] sm:$0xff]
    %s339 = smul.u32 %s172, 4
    %s340 = scvt.s32.f32 %s339
    %v341 = vmul.f32 %v318, %v178
    %v342 = vrot.slane %v341, 4
    %v343 = vadd.f32 %v341, %v342
    %v344 = vrot.slane %v343, 2
    %v345 = vadd.f32 %v343, %v344
    %v346 = vrot.slane %v345, 1
    %v347 = vadd.f32 %v345, %v346
    %v348 = vmul.f32 %v341, %v318
    %v349 = vrot.slane %v348, 4
    %v350 = vadd.f32 %v348, %v349
    %v351 = vrot.slane %v350, 2
    %v352 = vadd.f32 %v350, %v351
    %v353 = vrot.slane %v352, 1
    %v354 = vadd.f32 %v352, %v353
    %vm355 = vcmask 1040384
    %v356 = vsel %vm355, %v347, %v354
    %357 = vmatprep.subr.mxu0 0.0
    %358 = vmatpush1.msra.mxu0 %v323
    %359 = vmatprep.subr.mxu0 0.0
    %360 = vmatpush1.msra.mxu0 %v324
    %361 = vmatprep.subr.mxu0 0.0
    %362 = vmatpush1.msra.mxu0 %v325
    %363 = vmatprep.subr.mxu0 0.0
    %364 = vmatpush1.msra.mxu0 %v326
    %365 = vmatprep.subr.mxu0 0.0
    %366 = vmatpush1.msra.mxu0 %v327
    %367 = vmatprep.subr.mxu0 0.0
    %368 = vmatpush1.msra.mxu0 %v328
    %369 = vmatprep.subr.mxu0 0.0
    %370 = vmatpush1.msra.mxu0 %v329
    %371 = vmatprep.subr.mxu0 0.0
    %372 = vmatpush1.msra.mxu0 %v330
    %373 = vmatprep.subr.mxu0 0.0
    %374 = vmatpush1.msra.mxu0 %v331
    %375 = vmatprep.subr.mxu0 0.0
    %376 = vmatpush1.msra.mxu0 %v332
    %377 = vmatprep.subr.mxu0 0.0
    %378 = vmatpush1.msra.mxu0 %v333
    %379 = vmatprep.subr.mxu0 0.0
    %380 = vmatpush1.msra.mxu0 %v334
    %381 = vmatprep.subr.mxu0 0.0
    %382 = vmatpush1.msra.mxu0 %v335
    %383 = vmatprep.subr.mxu0 0.0
    %384 = vmatpush1.msra.mxu0 %v336
    %385 = vmatprep.subr.mxu0 0.0
    %386 = vmatpush1.msra.mxu0 %v337
    %387 = vmatprep.subr.mxu0 0.0
    %388 = vmatpush1.msra.mxu0 %v338
    %389 = vmatprep.subr.mxu0 0.0
    %390 = vmatpush1.msra.mxu0 0.0
    %391 = vmatprep.subr.mxu0 0.0
    %392 = vmatpush1.msra.mxu0 0.0
    %393 = vmatprep.subr.mxu0 0.0
    %394 = vmatpush1.msra.mxu0 0.0
    %395 = vmatprep.subr.mxu0 0.0
    %396 = vmatpush1.msra.mxu0 0.0
    %397 = vmatprep.subr.mxu0 0.0
    %398 = vmatpush1.msra.mxu0 0.0
    %399 = vmatprep.subr.mxu0 0.0
    %400 = vmatpush1.msra.mxu0 0.0
    %401 = vmatprep.subr.mxu0 0.0
    %402 = vmatpush1.msra.mxu0 0.0
    %403 = vmatprep.subr.mxu0 0.0
    %404 = vmatpush1.msra.mxu0 0.0
    %405 = vmatprep.subr.mxu0 0.0
    %406 = vmatpush1.msra.mxu0 0.0
    %407 = vmatprep.subr.mxu0 0.0
    %408 = vmatpush1.msra.mxu0 0.0
    %409 = vmatprep.subr.mxu0 0.0
    %410 = vmatpush1.msra.mxu0 0.0
    %411 = vmatprep.subr.mxu0 0.0
    %412 = vmatpush1.msra.mxu0 0.0
    %413 = vmatprep.subr.mxu0 0.0
    %414 = vmatpush1.msra.mxu0 0.0
    %415 = vmatprep.subr.mxu0 0.0
    %416 = vmatpush1.msra.mxu0 0.0
    %417 = vmatprep.subr.mxu0 0.0
    %418 = vmatpush1.msra.mxu0 0.0
    %419 = vmatprep.subr.mxu0 0.0
    %420 = vmatpush1.msra.mxu0 0.0
    %421 = vmatprep.mubr.f32.mxu0 0.0
    %422 = vmatmul.mubr.f32.gmra.mrb[0].mxu0 %v356
    %v423 = vpop.f32.mrb[0].mxu0
    %v424 = vadd.f32 0.0, %v423
    %v425 = vpop.f32.mrb[0].mxu0
    %426 = vdwg.mxu0
    %v427 = vstv %s340
    %v428 = vrcp.pop %v427
    %v429 = vmul.f32 %v424, %v428
    %v430 = vmul.f32 %v429, %v429
    %v432 = vrot.slane %v430, 7
    %v434 = vsub.f32 %v429, %v432
    %v435 = vmax.f32 %v434, 0.0
    %v436 = vld [vmem:[#allocation6] sm:$0x1]
    %v437 = vadd.f32 %v435, 1e-05
    %v438 = vrsqrt.pop %v437
    %v441 = vunpack.c.l.s4 1966171168
    %v442 = vunpack.c.0.s8 %v441
    %v443 = vlaneseq
    %v444 = vshrl.u32 %v443, 7
    %v445 = vsub.s32 %v442, %v444
    %v446 = vrot.slane %v438, %v445
    %v447 = vcombine.high %v446, %v446
    %v449 = vunpack.c.l.s4 1966171168
    %v450 = vunpack.c.0.s8 %v449
    %v451 = vlaneseq
    %v452 = vshrl.u32 %v451, 7
    %v453 = vsub.s32 %v450, %v452
    %v454 = vrot.slane %v447, %v453
    %v456 = vmul.f32 %v436, %v454
    %v457 = vld [vmem:[#allocation7] sm:$0x1]
    %v458 = vmul.f32 %v429, %v456
    %v459 = vsub.f32 %v457, %v458
    %v461 = vlaneseq
    %v462 = vshrl.u32 %v461, 7
    %v463 = vsub.s32 0, %v462
    %v464 = vrot.slane %v459, %v463
    %v466 = vsel %vm355, %v456, %v464
    %v467 = vld [vmem:[#allocation9] sm:$0xff]
    %v468 = vld [vmem:[#allocation9 + $0x8] sm:$0xff]
    %v469 = vld [vmem:[#allocation9 + $0x10] sm:$0xff]
    %v470 = vld [vmem:[#allocation9 + $0x18] sm:$0xff]
    %vm471 = vcmask 261120
    %v473 = vsel %vm471, %v466, 0
    %475 = vmatprep.subr.mxu0 0.0
    %476 = vmatpush1.msra.mxu0 %v467
    %477 = vmatprep.subr.mxu0 0.0
    %478 = vmatpush1.msra.mxu0 %v468
    %479 = vmatprep.subr.mxu0 0.0
    %480 = vmatpush1.msra.mxu0 %v469
    %481 = vmatprep.subr.mxu0 0.0
    %482 = vmatpush1.msra.mxu0 %v470
    %483 = vmatprep.subr.mxu0 0.0
    %484 = vmatpush1.msra.mxu0 0.0
    %485 = vmatprep.subr.mxu0 0.0
    %486 = vmatpush1.msra.mxu0 0.0
    %487 = vmatprep.subr.mxu0 0.0
    %488 = vmatpush1.msra.mxu0 0.0
    %489 = vmatprep.subr.mxu0 0.0
    %490 = vmatpush1.msra.mxu0 0.0
    %491 = vmatprep.subr.mxu0 0.0
    %492 = vmatpush1.msra.mxu0 0.0
    %493 = vmatprep.subr.mxu0 0.0
    %494 = vmatpush1.msra.mxu0 0.0
    %495 = vmatprep.subr.mxu0 0.0
    %496 = vmatpush1.msra.mxu0 0.0
    %497 = vmatprep.subr.mxu0 0.0
    %498 = vmatpush1.msra.mxu0 0.0
    %499 = vmatprep.subr.mxu0 0.0
    %500 = vmatpush1.msra.mxu0 0.0
    %501 = vmatprep.subr.mxu0 0.0
    %502 = vmatpush1.msra.mxu0 0.0
    %503 = vmatprep.subr.mxu0 0.0
    %504 = vmatpush1.msra.mxu0 0.0
    %505 = vmatprep.subr.mxu0 0.0
    %506 = vmatpush1.msra.mxu0 0.0
    %507 = vmatprep.subr.mxu0 0.0
    %508 = vmatpush1.msra.mxu0 0.0
    %509 = vmatprep.subr.mxu0 0.0
    %510 = vmatpush1.msra.mxu0 0.0
    %511 = vmatprep.subr.mxu0 0.0
    %512 = vmatpush1.msra.mxu0 0.0
    %513 = vmatprep.subr.mxu0 0.0
    %514 = vmatpush1.msra.mxu0 0.0
    %515 = vmatprep.subr.mxu0 0.0
    %516 = vmatpush1.msra.mxu0 0.0
    %517 = vmatprep.subr.mxu0 0.0
    %518 = vmatpush1.msra.mxu0 0.0
    %519 = vmatprep.subr.mxu0 0.0
    %520 = vmatpush1.msra.mxu0 0.0
    %521 = vmatprep.subr.mxu0 0.0
    %522 = vmatpush1.msra.mxu0 0.0
    %523 = vmatprep.subr.mxu0 0.0
    %524 = vmatpush1.msra.mxu0 0.0
    %525 = vmatprep.subr.mxu0 0.0
    %526 = vmatpush1.msra.mxu0 0.0
    %527 = vmatprep.subr.mxu0 0.0
    %528 = vmatpush1.msra.mxu0 0.0
    %529 = vmatprep.subr.mxu0 0.0
    %530 = vmatpush1.msra.mxu0 0.0
    %531 = vmatprep.subr.mxu0 0.0
    %532 = vmatpush1.msra.mxu0 0.0
    %533 = vmatprep.subr.mxu0 0.0
    %534 = vmatpush1.msra.mxu0 0.0
    %535 = vmatprep.subr.mxu0 0.0
    %536 = vmatpush1.msra.mxu0 0.0
    %537 = vmatprep.subr.mxu0 0.0
    %538 = vmatpush1.msra.mxu0 0.0
    %539 = vmatprep.mubr.f32.mxu0 0.0
    %540 = vmatmul.mubr.f32.gmra.mrb[0].mxu0 %v473
    %v541 = vpop.f32.mrb[0].mxu0
    %v542 = vadd.f32 0.0, %v541
    %v543 = vpop.f32.mrb[0].mxu0
    %544 = vdwg.mxu0
    %v545 = vlaneseq
    %v546 = vshrl.u32 %v545, 7
    %v547 = vsub.s32 0, %v546
    %v548 = vrot.slane %v542, %v547
    %v549 = vmul.f32 %v318, %v548
    %v550 = vlaneseq
    %v551 = vshrl.u32 %v550, 7
    %v552 = vsub.s32 1, %v551
    %v553 = vrot.slane %v542, %v552
    %v554 = vadd.f32 %v549, %v553
    %vm555 = vcmp.gt.f32.partialorder %v554, 0.0
    %v556 = vmin.f32 %v554, 0.0
    %v557 = vmul.f32 %v556, 1.442695
    %v558 = vpow.pop %v557
    %v559 = vsub.f32 %v558, 1.0
    %v560 = vsel %vm555, %v554, %v559
    %v561 = vpack.c.bf16 %v560, %v560
    %v562 = vld [vmem:[#allocation10] sm:$0xff]
    %v563 = vld [vmem:[#allocation10 + $0x8] sm:$0xff]
    %v564 = vld [vmem:[#allocation10 + $0x10] sm:$0xff]
    %v565 = vld [vmem:[#allocation10 + $0x18] sm:$0xff]
    %v566 = vld [vmem:[#allocation10 + $0x20] sm:$0xff]
    %v567 = vld [vmem:[#allocation10 + $0x28] sm:$0xff]
    %v568 = vld [vmem:[#allocation10 + $0x30] sm:$0xff]
    %v569 = vld [vmem:[#allocation10 + $0x38] sm:$0xff]
    %v570 = vld [vmem:[#allocation10 + $0x40] sm:$0xff]
    %v571 = vld [vmem:[#allocation10 + $0x48] sm:$0xff]
    %v572 = vld [vmem:[#allocation10 + $0x50] sm:$0xff]
    %v573 = vld [vmem:[#allocation10 + $0x58] sm:$0xff]
    %v574 = vld [vmem:[#allocation10 + $0x60] sm:$0xff]
    %v575 = vld [vmem:[#allocation10 + $0x68] sm:$0xff]
    %v576 = vld [vmem:[#allocation10 + $0x70] sm:$0xff]
    %v577 = vld [vmem:[#allocation10 + $0x78] sm:$0xff]
    %v594 = vunpack.c.l.b16 %v562
    %v595 = vunpack.c.h.b16 %v562
    %v596 = vunpack.c.l.b16 %v563
    %v597 = vunpack.c.h.b16 %v563
    %v598 = vunpack.c.l.b16 %v564
    %v599 = vunpack.c.h.b16 %v564
    %v600 = vunpack.c.l.b16 %v565
    %v601 = vunpack.c.h.b16 %v565
    %v602 = vunpack.c.l.b16 %v566
    %v603 = vunpack.c.h.b16 %v566
    %v604 = vunpack.c.l.b16 %v567
    %v605 = vunpack.c.h.b16 %v567
    %v606 = vunpack.c.l.b16 %v568
    %v607 = vunpack.c.h.b16 %v568
    %v608 = vunpack.c.l.b16 %v569
    %v609 = vunpack.c.h.b16 %v569
    %v610 = vunpack.c.l.b16 %v570
    %v611 = vunpack.c.h.b16 %v570
    %v612 = vunpack.c.l.b16 %v571
    %v613 = vunpack.c.h.b16 %v571
    %v614 = vunpack.c.l.b16 %v572
    %v615 = vunpack.c.h.b16 %v572
    %v616 = vunpack.c.l.b16 %v573
    %v617 = vunpack.c.h.b16 %v573
    %v618 = vunpack.c.l.b16 %v574
    %v619 = vunpack.c.h.b16 %v574
    %v620 = vunpack.c.l.b16 %v575
    %v621 = vunpack.c.h.b16 %v575
    %v622 = vunpack.c.l.b16 %v576
    %v623 = vunpack.c.h.b16 %v576
    %v624 = vunpack.c.l.b16 %v577
    %v625 = vunpack.c.h.b16 %v577
    %v626 = vpack.c.b16 %v596, %v594
    %v627 = vpack.c.b16 %v597, %v595
    %v628 = vpack.c.b16 %v600, %v598
    %v629 = vpack.c.b16 %v601, %v599
    %v630 = vpack.c.b16 %v604, %v602
    %v631 = vpack.c.b16 %v605, %v603
    %v632 = vpack.c.b16 %v608, %v606
    %v633 = vpack.c.b16 %v609, %v607
    %v634 = vpack.c.b16 %v612, %v610
    %v635 = vpack.c.b16 %v613, %v611
    %v636 = vpack.c.b16 %v616, %v614
    %v637 = vpack.c.b16 %v617, %v615
    %v638 = vpack.c.b16 %v620, %v618
    %v639 = vpack.c.b16 %v621, %v619
    %v640 = vpack.c.b16 %v624, %v622
    %v641 = vpack.c.b16 %v625, %v623
    %658 = vmatprep.subr.bf16.mxu0 %v627
    %659 = vmatpush1.bf16.msra.mxu0 %v626
    %660 = vmatprep.subr.bf16.mxu0 %v629
    %661 = vmatpush1.bf16.msra.mxu0 %v628
    %662 = vmatprep.subr.bf16.mxu0 %v631
    %663 = vmatpush1.bf16.msra.mxu0 %v630
    %664 = vmatprep.subr.bf16.mxu0 %v633
    %665 = vmatpush1.bf16.msra.mxu0 %v632
    %666 = vmatprep.subr.bf16.mxu0 %v635
    %667 = vmatpush1.bf16.msra.mxu0 %v634
    %668 = vmatprep.subr.bf16.mxu0 %v637
    %669 = vmatpush1.bf16.msra.mxu0 %v636
    %670 = vmatprep.subr.bf16.mxu0 %v639
    %671 = vmatpush1.bf16.msra.mxu0 %v638
    %672 = vmatprep.subr.bf16.mxu0 %v641
    %673 = vmatpush1.bf16.msra.mxu0 %v640
    %674 = vmatprep.subr.bf16.mxu0 0
    %675 = vmatpush1.bf16.msra.mxu0 0
    %676 = vmatprep.subr.bf16.mxu0 0
    %677 = vmatpush1.bf16.msra.mxu0 0
    %678 = vmatprep.subr.bf16.mxu0 0
    %679 = vmatpush1.bf16.msra.mxu0 0
    %680 = vmatprep.subr.bf16.mxu0 0
    %681 = vmatpush1.bf16.msra.mxu0 0
    %682 = vmatprep.subr.bf16.mxu0 0
    %683 = vmatpush1.bf16.msra.mxu0 0
    %684 = vmatprep.subr.bf16.mxu0 0
    %685 = vmatpush1.bf16.msra.mxu0 0
    %686 = vmatprep.subr.bf16.mxu0 0
    %687 = vmatpush1.bf16.msra.mxu0 0
    %688 = vmatprep.subr.bf16.mxu0 0
    %689 = vmatpush1.bf16.msra.mxu0 0
    %690 = vmatprep.mubr.bf16.mxu0 0
    %691 = vmatmul.mubr.bf16.gmra.mrb[0].mxu0 %v561
    %v692 = vpop.f32.mrb[0].mxu0
    %v693 = vadd.f32 0.0, %v692
    %v694 = vpop.f32.mrb[0].mxu0
    %v695 = vadd.f32 0.0, %v694
    %v696 = vpop.f32.mrb[0].mxu0
    %v697 = vpop.f32.mrb[0].mxu0
    %698 = vdwg.mxu0
    %v699 = vld [vmem:[%s11] sm:$0xff]
    %v700 = vld [vmem:[%s11 + $0x8] sm:$0xff]
    %v701 = vld [vmem:[%s11 + $0x10] sm:$0xff]
    %v702 = vld [vmem:[%s11 + $0x18] sm:$0xff]
    %v703 = vld [vmem:[%s11 + $0x20] sm:$0xff]
    %v704 = vld [vmem:[%s11 + $0x28] sm:$0xff]
    %v705 = vld [vmem:[%s11 + $0x30] sm:$0xff]
    %v706 = vld [vmem:[%s11 + $0x38] sm:$0xff]
    %v707 = vld [vmem:[%s11 + $0x40] sm:$0xff]
    %v708 = vld [vmem:[%s11 + $0x48] sm:$0xff]
    %v709 = vld [vmem:[%s11 + $0x50] sm:$0xff]
    %v710 = vld [vmem:[%s11 + $0x58] sm:$0xff]
    %v711 = vld [vmem:[%s11 + $0x60] sm:$0xff]
    %v712 = vld [vmem:[%s11 + $0x68] sm:$0xff]
    %v713 = vld [vmem:[%s11 + $0x70] sm:$0xff]
    %v714 = vld [vmem:[%s11 + $0x78] sm:$0xff]
    %v715 = vld [vmem:[%s11 + $0x80] sm:$0xff]
    %v716 = vld [vmem:[%s11 + $0x88] sm:$0xff]
    %v717 = vld [vmem:[%s11 + $0x90] sm:$0xff]
    %v718 = vld [vmem:[%s11 + $0x98] sm:$0xff]
    %v719 = vld [vmem:[%s11 + $0xa0] sm:$0xff]
    %v720 = vld [vmem:[%s11 + $0xa8] sm:$0xff]
    %v721 = vld [vmem:[%s11 + $0xb0] sm:$0xff]
    %v722 = vld [vmem:[%s11 + $0xb8] sm:$0xff]
    %v723 = vld [vmem:[%s11 + $0xc0] sm:$0xff]
    %v724 = vld [vmem:[%s11 + $0xc8] sm:$0xff]
    %v725 = vld [vmem:[%s11 + $0xd0] sm:$0xff]
    %v726 = vld [vmem:[%s11 + $0xd8] sm:$0xff]
    %v727 = vld [vmem:[%s11 + $0xe0] sm:$0xff]
    %v728 = vld [vmem:[%s11 + $0xe8] sm:$0xff]
    %v729 = vld [vmem:[%s11 + $0xf0] sm:$0xff]
    %v730 = vld [vmem:[%s11 + $0xf8] sm:$0xff]
    %s731 = smul.u32 %s172, 16
    %s732 = scvt.s32.f32 %s731
    %v733 = vmul.f32 %v693, %v178
    %v734 = vmul.f32 %v695, %v178
    %v735 = vrot.slane %v733, 4
    %v736 = vadd.f32 %v733, %v735
    %v737 = vrot.slane %v736, 2
    %v738 = vadd.f32 %v736, %v737
    %v739 = vrot.slane %v738, 1
    %v740 = vadd.f32 %v738, %v739
    %v741 = vrot.slane %v734, 4
    %v742 = vadd.f32 %v734, %v741
    %v743 = vrot.slane %v742, 2
    %v744 = vadd.f32 %v742, %v743
    %v745 = vrot.slane %v744, 1
    %v746 = vadd.f32 %v744, %v745
    %v747 = vmul.f32 %v733, %v693
    %v748 = vmul.f32 %v734, %v695
    %v749 = vrot.slane %v747, 4
    %v750 = vadd.f32 %v747, %v749
    %v751 = vrot.slane %v750, 2
    %v752 = vadd.f32 %v750, %v751
    %v753 = vrot.slane %v752, 1
    %v754 = vadd.f32 %v752, %v753
    %v755 = vrot.slane %v748, 4
    %v756 = vadd.f32 %v748, %v755
    %v757 = vrot.slane %v756, 2
    %v758 = vadd.f32 %v756, %v757
    %v759 = vrot.slane %v758, 1
    %v760 = vadd.f32 %v758, %v759
    %v761 = vsel %vm355, %v740, %v754
    %v762 = vsel %vm355, %v746, %v760
    %763 = vmatprep.subr.mxu0 0.0
    %764 = vmatpush1.msra.mxu0 %v699
    %765 = vmatprep.subr.mxu0 0.0
    %766 = vmatpush1.msra.mxu0 %v700
    %767 = vmatprep.subr.mxu0 0.0
    %768 = vmatpush1.msra.mxu0 %v701
    %769 = vmatprep.subr.mxu0 0.0
    %770 = vmatpush1.msra.mxu0 %v702
    %771 = vmatprep.subr.mxu0 0.0
    %772 = vmatpush1.msra.mxu0 %v703
    %773 = vmatprep.subr.mxu0 0.0
    %774 = vmatpush1.msra.mxu0 %v704
    %775 = vmatprep.subr.mxu0 0.0
    %776 = vmatpush1.msra.mxu0 %v705
    %777 = vmatprep.subr.mxu0 0.0
    %778 = vmatpush1.msra.mxu0 %v706
    %779 = vmatprep.subr.mxu0 0.0
    %780 = vmatpush1.msra.mxu0 %v707
    %781 = vmatprep.subr.mxu0 0.0
    %782 = vmatpush1.msra.mxu0 %v708
    %783 = vmatprep.subr.mxu0 0.0
    %784 = vmatpush1.msra.mxu0 %v709
    %785 = vmatprep.subr.mxu0 0.0
    %786 = vmatpush1.msra.mxu0 %v710
    %787 = vmatprep.subr.mxu0 0.0
    %788 = vmatpush1.msra.mxu0 %v711
    %789 = vmatprep.subr.mxu0 0.0
    %790 = vmatpush1.msra.mxu0 %v712
    %791 = vmatprep.subr.mxu0 0.0
    %792 = vmatpush1.msra.mxu0 %v713
    %793 = vmatprep.subr.mxu0 0.0
    %794 = vmatpush1.msra.mxu0 %v714
    %795 = vmatprep.subr.mxu0 0.0
    %796 = vmatpush1.msra.mxu0 %v715
    %797 = vmatprep.subr.mxu0 0.0
    %798 = vmatpush1.msra.mxu0 %v716
    %799 = vmatprep.subr.mxu0 0.0
    %800 = vmatpush1.msra.mxu0 %v717
    %801 = vmatprep.subr.mxu0 0.0
    %802 = vmatpush1.msra.mxu0 %v718
    %803 = vmatprep.subr.mxu0 0.0
    %804 = vmatpush1.msra.mxu0 %v719
    %805 = vmatprep.subr.mxu0 0.0
    %806 = vmatpush1.msra.mxu0 %v720
    %807 = vmatprep.subr.mxu0 0.0
    %808 = vmatpush1.msra.mxu0 %v721
    %809 = vmatprep.subr.mxu0 0.0
    %810 = vmatpush1.msra.mxu0 %v722
    %811 = vmatprep.subr.mxu0 0.0
    %812 = vmatpush1.msra.mxu0 %v723
    %813 = vmatprep.subr.mxu0 0.0
    %814 = vmatpush1.msra.mxu0 %v724
    %815 = vmatprep.subr.mxu0 0.0
    %816 = vmatpush1.msra.mxu0 %v725
    %817 = vmatprep.subr.mxu0 0.0
    %818 = vmatpush1.msra.mxu0 %v726
    %819 = vmatprep.subr.mxu0 0.0
    %820 = vmatpush1.msra.mxu0 %v727
    %821 = vmatprep.subr.mxu0 0.0
    %822 = vmatpush1.msra.mxu0 %v728
    %823 = vmatprep.subr.mxu0 0.0
    %824 = vmatpush1.msra.mxu0 %v729
    %825 = vmatprep.subr.mxu0 0.0
    %826 = vmatpush1.msra.mxu0 %v730
    %827 = vmatprep.mubr.f32.mxu0 %v762
    %828 = vmatmul.mubr.f32.gmra.mrb[0].mxu0 %v761
    %v829 = vpop.f32.mrb[0].mxu0
    %v830 = vadd.f32 0.0, %v829
    %v831 = vpop.f32.mrb[0].mxu0
    %832 = vdwg.mxu0
    %v833 = vstv %s732
    %v834 = vrcp.pop %v833
    %v835 = vmul.f32 %v830, %v834
    %v836 = vmul.f32 %v835, %v835
    %v838 = vrot.slane %v836, 7
    %v840 = vsub.f32 %v835, %v838
    %v841 = vmax.f32 %v840, 0.0
    %v842 = vld [vmem:[%s9] sm:$0x1]
    %v843 = vadd.f32 %v841, 1e-05
    %v844 = vrsqrt.pop %v843
    %v847 = vunpack.c.l.s4 1966171168
    %v848 = vunpack.c.0.s8 %v847
    %v849 = vlaneseq
    %v850 = vshrl.u32 %v849, 7
    %v851 = vsub.s32 %v848, %v850
    %v852 = vrot.slane %v844, %v851
    %v853 = vcombine.high %v852, %v852
    %v855 = vunpack.c.l.s4 1966171168
    %v856 = vunpack.c.0.s8 %v855
    %v857 = vlaneseq
    %v858 = vshrl.u32 %v857, 7
    %v859 = vsub.s32 %v856, %v858
    %v860 = vrot.slane %v853, %v859
    %v862 = vmul.f32 %v842, %v860
    %v863 = vld [vmem:[%s10] sm:$0x1]
    %v864 = vmul.f32 %v835, %v862
    %v865 = vsub.f32 %v863, %v864
    %v867 = vlaneseq
    %v868 = vshrl.u32 %v867, 7
    %v869 = vsub.s32 0, %v868
    %v870 = vrot.slane %v865, %v869
    %v872 = vsel %vm355, %v862, %v870
    %v873 = vld [vmem:[#allocation12] sm:$0xff]
    %v874 = vld [vmem:[#allocation12 + $0x8] sm:$0xff]
    %v875 = vld [vmem:[#allocation12 + $0x10] sm:$0xff]
    %v876 = vld [vmem:[#allocation12 + $0x18] sm:$0xff]
    %v878 = vsel %vm196, %v872, 0
    %880 = vmatprep.subr.mxu0 %v874
    %881 = vmatpush1.msra.mxu0 %v873
    %882 = vmatprep.subr.mxu0 %v876
    %883 = vmatpush1.msra.mxu0 %v875
    %884 = vmatprep.subr.mxu0 0.0
    %885 = vmatpush1.msra.mxu0 0.0
    %886 = vmatprep.subr.mxu0 0.0
    %887 = vmatpush1.msra.mxu0 0.0
    %888 = vmatprep.subr.mxu0 0.0
    %889 = vmatpush1.msra.mxu0 0.0
    %890 = vmatprep.subr.mxu0 0.0
    %891 = vmatpush1.msra.mxu0 0.0
    %892 = vmatprep.subr.mxu0 0.0
    %893 = vmatpush1.msra.mxu0 0.0
    %894 = vmatprep.subr.mxu0 0.0
    %895 = vmatpush1.msra.mxu0 0.0
    %896 = vmatprep.subr.mxu0 0.0
    %897 = vmatpush1.msra.mxu0 0.0
    %898 = vmatprep.subr.mxu0 0.0
    %899 = vmatpush1.msra.mxu0 0.0
    %900 = vmatprep.subr.mxu0 0.0
    %901 = vmatpush1.msra.mxu0 0.0
    %902 = vmatprep.subr.mxu0 0.0
    %903 = vmatpush1.msra.mxu0 0.0
    %904 = vmatprep.subr.mxu0 0.0
    %905 = vmatpush1.msra.mxu0 0.0
    %906 = vmatprep.subr.mxu0 0.0
    %907 = vmatpush1.msra.mxu0 0.0
    %908 = vmatprep.subr.mxu0 0.0
    %909 = vmatpush1.msra.mxu0 0.0
    %910 = vmatprep.subr.mxu0 0.0
    %911 = vmatpush1.msra.mxu0 0.0
    %912 = vmatprep.subr.mxu0 0.0
    %913 = vmatpush1.msra.mxu0 0.0
    %914 = vmatprep.subr.mxu0 0.0
    %915 = vmatpush1.msra.mxu0 0.0
    %916 = vmatprep.subr.mxu0 0.0
    %917 = vmatpush1.msra.mxu0 0.0
    %918 = vmatprep.subr.mxu0 0.0
    %919 = vmatpush1.msra.mxu0 0.0
    %920 = vmatprep.subr.mxu0 0.0
    %921 = vmatpush1.msra.mxu0 0.0
    %922 = vmatprep.subr.mxu0 0.0
    %923 = vmatpush1.msra.mxu0 0.0
    %924 = vmatprep.subr.mxu0 0.0
    %925 = vmatpush1.msra.mxu0 0.0
    %926 = vmatprep.subr.mxu0 0.0
    %927 = vmatpush1.msra.mxu0 0.0
    %928 = vmatprep.subr.mxu0 0.0
    %929 = vmatpush1.msra.mxu0 0.0
    %930 = vmatprep.subr.mxu0 0.0
    %931 = vmatpush1.msra.mxu0 0.0
    %932 = vmatprep.subr.mxu0 0.0
    %933 = vmatpush1.msra.mxu0 0.0
    %934 = vmatprep.subr.mxu0 0.0
    %935 = vmatpush1.msra.mxu0 0.0
    %936 = vmatprep.subr.mxu0 0.0
    %937 = vmatpush1.msra.mxu0 0.0
    %938 = vmatprep.subr.mxu0 0.0
    %939 = vmatpush1.msra.mxu0 0.0
    %940 = vmatprep.subr.mxu0 0.0
    %941 = vmatpush1.msra.mxu0 0.0
    %942 = vmatprep.subr.mxu0 0.0
    %943 = vmatpush1.msra.mxu0 0.0
    %944 = vmatprep.mubr.f32.mxu0 0.0
    %945 = vmatmul.mubr.f32.gmra.mrb[0].mxu0 %v878
    %v946 = vpop.f32.mrb[0].mxu0
    %v947 = vadd.f32 0.0, %v946
    %v948 = vpop.f32.mrb[0].mxu0
    %v949 = vadd.f32 0.0, %v948
    %950 = vdwg.mxu0
    %v951 = vlaneseq
    %v952 = vshrl.u32 %v951, 7
    %v953 = vsub.s32 0, %v952
    %v954 = vrot.slane %v947, %v953
    %v955 = vlaneseq
    %v956 = vshrl.u32 %v955, 7
    %v957 = vsub.s32 0, %v956
    %v958 = vrot.slane %v949, %v957
    %v959 = vmul.f32 %v693, %v954
    %v960 = vmul.f32 %v695, %v958
    %v961 = vlaneseq
    %v962 = vshrl.u32 %v961, 7
    %v963 = vsub.s32 1, %v962
    %v964 = vrot.slane %v947, %v963
    %v965 = vlaneseq
    %v966 = vshrl.u32 %v965, 7
    %v967 = vsub.s32 1, %v966
    %v968 = vrot.slane %v949, %v967
    %v969 = vadd.f32 %v959, %v964
    %v970 = vadd.f32 %v960, %v968
    %vm971 = vcmp.gt.f32.partialorder %v969, 0.0
    %vm972 = vcmp.gt.f32.partialorder %v970, 0.0
    %v973 = vmin.f32 %v969, 0.0
    %v974 = vmin.f32 %v970, 0.0
    %v975 = vmul.f32 %v973, 1.442695
    %v976 = vpow.pop %v975
    %v977 = vmul.f32 %v974, 1.442695
    %v978 = vpow.pop %v977
    %v979 = vsub.f32 %v976, 1.0
    %v980 = vsub.f32 %v978, 1.0
    %v981 = vsel %vm971, %v969, %v979
    %v982 = vsel %vm972, %v970, %v980
    %v983 = vpack.c.bf16 %v981, %v981
    %v984 = vpack.c.bf16 %v982, %v982
    %v985 = vld [vmem:[%s13] sm:$0xff]
    %v986 = vld [vmem:[%s13 + $0x8] sm:$0xff]
    %v987 = vld [vmem:[%s13 + $0x10] sm:$0xff]
    %v988 = vld [vmem:[%s13 + $0x18] sm:$0xff]
    %v989 = vld [vmem:[%s13 + $0x20] sm:$0xff]
    %v990 = vld [vmem:[%s13 + $0x28] sm:$0xff]
    %v991 = vld [vmem:[%s13 + $0x30] sm:$0xff]
    %v992 = vld [vmem:[%s13 + $0x38] sm:$0xff]
    %v993 = vld [vmem:[%s13 + $0x40] sm:$0xff]
    %v994 = vld [vmem:[%s13 + $0x48] sm:$0xff]
    %v995 = vld [vmem:[%s13 + $0x50] sm:$0xff]
    %v996 = vld [vmem:[%s13 + $0x58] sm:$0xff]
    %v997 = vld [vmem:[%s13 + $0x60] sm:$0xff]
    %v998 = vld [vmem:[%s13 + $0x68] sm:$0xff]
    %v999 = vld [vmem:[%s13 + $0x70] sm:$0xff]
    %v1000 = vld [vmem:[%s13 + $0x78] sm:$0xff]
    %v1001 = vld [vmem:[%s13 + $0x80] sm:$0xff]
    %v1002 = vld [vmem:[%s13 + $0x88] sm:$0xff]
    %v1003 = vld [vmem:[%s13 + $0x90] sm:$0xff]
    %v1004 = vld [vmem:[%s13 + $0x98] sm:$0xff]
    %v1005 = vld [vmem:[%s13 + $0xa0] sm:$0xff]
    %v1006 = vld [vmem:[%s13 + $0xa8] sm:$0xff]
    %v1007 = vld [vmem:[%s13 + $0xb0] sm:$0xff]
    %v1008 = vld [vmem:[%s13 + $0xb8] sm:$0xff]
    %v1009 = vld [vmem:[%s13 + $0xc0] sm:$0xff]
    %v1010 = vld [vmem:[%s13 + $0xc8] sm:$0xff]
    %v1011 = vld [vmem:[%s13 + $0xd0] sm:$0xff]
    %v1012 = vld [vmem:[%s13 + $0xd8] sm:$0xff]
    %v1013 = vld [vmem:[%s13 + $0xe0] sm:$0xff]
    %v1014 = vld [vmem:[%s13 + $0xe8] sm:$0xff]
    %v1015 = vld [vmem:[%s13 + $0xf0] sm:$0xff]
    %v1016 = vld [vmem:[%s13 + $0xf8] sm:$0xff]
    %v1017 = vld [vmem:[%s13 + $0x100] sm:$0xff]
    %v1018 = vld [vmem:[%s13 + $0x108] sm:$0xff]
    %v1019 = vld [vmem:[%s13 + $0x110] sm:$0xff]
    %v1020 = vld [vmem:[%s13 + $0x118] sm:$0xff]
    %v1021 = vld [vmem:[%s13 + $0x120] sm:$0xff]
    %v1022 = vld [vmem:[%s13 + $0x128] sm:$0xff]
    %v1023 = vld [vmem:[%s13 + $0x130] sm:$0xff]
    %v1024 = vld [vmem:[%s13 + $0x138] sm:$0xff]
    %v1025 = vld [vmem:[%s13 + $0x140] sm:$0xff]
    %v1026 = vld [vmem:[%s13 + $0x148] sm:$0xff]
    %v1027 = vld [vmem:[%s13 + $0x150] sm:$0xff]
    %v1028 = vld [vmem:[%s13 + $0x158] sm:$0xff]
    %v1029 = vld [vmem:[%s13 + $0x160] sm:$0xff]
    %v1030 = vld [vmem:[%s13 + $0x168] sm:$0xff]
    %v1031 = vld [vmem:[%s13 + $0x170] sm:$0xff]
    %v1032 = vld [vmem:[%s13 + $0x178] sm:$0xff]
    %v1033 = vld [vmem:[%s13 + $0x180] sm:$0xff]
    %v1034 = vld [vmem:[%s13 + $0x188] sm:$0xff]
    %v1035 = vld [vmem:[%s13 + $0x190] sm:$0xff]
    %v1036 = vld [vmem:[%s13 + $0x198] sm:$0xff]
    %v1037 = vld [vmem:[%s13 + $0x1a0] sm:$0xff]
    %v1038 = vld [vmem:[%s13 + $0x1a8] sm:$0xff]
    %v1039 = vld [vmem:[%s13 + $0x1b0] sm:$0xff]
    %v1040 = vld [vmem:[%s13 + $0x1b8] sm:$0xff]
    %v1041 = vld [vmem:[%s13 + $0x1c0] sm:$0xff]
    %v1042 = vld [vmem:[%s13 + $0x1c8] sm:$0xff]
    %v1043 = vld [vmem:[%s13 + $0x1d0] sm:$0xff]
    %v1044 = vld [vmem:[%s13 + $0x1d8] sm:$0xff]
    %v1045 = vld [vmem:[%s13 + $0x1e0] sm:$0xff]
    %v1046 = vld [vmem:[%s13 + $0x1e8] sm:$0xff]
    %v1047 = vld [vmem:[%s13 + $0x1f0] sm:$0xff]
    %v1048 = vld [vmem:[%s13 + $0x1f8] sm:$0xff]
    %v1113 = vunpack.c.l.b16 %v985
    %v1114 = vunpack.c.h.b16 %v985
    %v1115 = vunpack.c.l.b16 %v986
    %v1116 = vunpack.c.h.b16 %v986
    %v1117 = vunpack.c.l.b16 %v987
    %v1118 = vunpack.c.h.b16 %v987
    %v1119 = vunpack.c.l.b16 %v988
    %v1120 = vunpack.c.h.b16 %v988
    %v1121 = vunpack.c.l.b16 %v989
    %v1122 = vunpack.c.h.b16 %v989
    %v1123 = vunpack.c.l.b16 %v990
    %v1124 = vunpack.c.h.b16 %v990
    %v1125 = vunpack.c.l.b16 %v991
    %v1126 = vunpack.c.h.b16 %v991
    %v1127 = vunpack.c.l.b16 %v992
    %v1128 = vunpack.c.h.b16 %v992
    %v1129 = vunpack.c.l.b16 %v993
    %v1130 = vunpack.c.h.b16 %v993
    %v1131 = vunpack.c.l.b16 %v994
    %v1132 = vunpack.c.h.b16 %v994
    %v1133 = vunpack.c.l.b16 %v995
    %v1134 = vunpack.c.h.b16 %v995
    %v1135 = vunpack.c.l.b16 %v996
    %v1136 = vunpack.c.h.b16 %v996
    %v1137 = vunpack.c.l.b16 %v997
    %v1138 = vunpack.c.h.b16 %v997
    %v1139 = vunpack.c.l.b16 %v998
    %v1140 = vunpack.c.h.b16 %v998
    %v1141 = vunpack.c.l.b16 %v999
    %v1142 = vunpack.c.h.b16 %v999
    %v1143 = vunpack.c.l.b16 %v1000
    %v1144 = vunpack.c.h.b16 %v1000
    %v1145 = vunpack.c.l.b16 %v1001
    %v1146 = vunpack.c.h.b16 %v1001
    %v1147 = vunpack.c.l.b16 %v1002
    %v1148 = vunpack.c.h.b16 %v1002
    %v1149 = vunpack.c.l.b16 %v1003
    %v1150 = vunpack.c.h.b16 %v1003
    %v1151 = vunpack.c.l.b16 %v1004
    %v1152 = vunpack.c.h.b16 %v1004
    %v1153 = vunpack.c.l.b16 %v1005
    %v1154 = vunpack.c.h.b16 %v1005
    %v1155 = vunpack.c.l.b16 %v1006
    %v1156 = vunpack.c.h.b16 %v1006
    %v1157 = vunpack.c.l.b16 %v1007
    %v1158 = vunpack.c.h.b16 %v1007
    %v1159 = vunpack.c.l.b16 %v1008
    %v1160 = vunpack.c.h.b16 %v1008
    %v1161 = vunpack.c.l.b16 %v1009
    %v1162 = vunpack.c.h.b16 %v1009
    %v1163 = vunpack.c.l.b16 %v1010
    %v1164 = vunpack.c.h.b16 %v1010
    %v1165 = vunpack.c.l.b16 %v1011
    %v1166 = vunpack.c.h.b16 %v1011
    %v1167 = vunpack.c.l.b16 %v1012
    %v1168 = vunpack.c.h.b16 %v1012
    %v1169 = vunpack.c.l.b16 %v1013
    %v1170 = vunpack.c.h.b16 %v1013
    %v1171 = vunpack.c.l.b16 %v1014
    %v1172 = vunpack.c.h.b16 %v1014
    %v1173 = vunpack.c.l.b16 %v1015
    %v1174 = vunpack.c.h.b16 %v1015
    %v1175 = vunpack.c.l.b16 %v1016
    %v1176 = vunpack.c.h.b16 %v1016
    %v1177 = vunpack.c.l.b16 %v1017
    %v1178 = vunpack.c.h.b16 %v1017
    %v1179 = vunpack.c.l.b16 %v1018
    %v1180 = vunpack.c.h.b16 %v1018
    %v1181 = vunpack.c.l.b16 %v1019
    %v1182 = vunpack.c.h.b16 %v1019
    %v1183 = vunpack.c.l.b16 %v1020
    %v1184 = vunpack.c.h.b16 %v1020
    %v1185 = vunpack.c.l.b16 %v1021
    %v1186 = vunpack.c.h.b16 %v1021
    %v1187 = vunpack.c.l.b16 %v1022
    %v1188 = vunpack.c.h.b16 %v1022
    %v1189 = vunpack.c.l.b16 %v1023
    %v1190 = vunpack.c.h.b16 %v1023
    %v1191 = vunpack.c.l.b16 %v1024
    %v1192 = vunpack.c.h.b16 %v1024
    %v1193 = vunpack.c.l.b16 %v1025
    %v1194 = vunpack.c.h.b16 %v1025
    %v1195 = vunpack.c.l.b16 %v1026
    %v1196 = vunpack.c.h.b16 %v1026
    %v1197 = vunpack.c.l.b16 %v1027
    %v1198 = vunpack.c.h.b16 %v1027
    %v1199 = vunpack.c.l.b16 %v1028
    %v1200 = vunpack.c.h.b16 %v1028
    %v1201 = vunpack.c.l.b16 %v1029
    %v1202 = vunpack.c.h.b16 %v1029
    %v1203 = vunpack.c.l.b16 %v1030
    %v1204 = vunpack.c.h.b16 %v1030
    %v1205 = vunpack.c.l.b16 %v1031
    %v1206 = vunpack.c.h.b16 %v1031
    %v1207 = vunpack.c.l.b16 %v1032
    %v1208 = vunpack.c.h.b16 %v1032
    %v1209 = vunpack.c.l.b16 %v1033
    %v1210 = vunpack.c.h.b16 %v1033
    %v1211 = vunpack.c.l.b16 %v1034
    %v1212 = vunpack.c.h.b16 %v1034
    %v1213 = vunpack.c.l.b16 %v1035
    %v1214 = vunpack.c.h.b16 %v1035
    %v1215 = vunpack.c.l.b16 %v1036
    %v1216 = vunpack.c.h.b16 %v1036
    %v1217 = vunpack.c.l.b16 %v1037
    %v1218 = vunpack.c.h.b16 %v1037
    %v1219 = vunpack.c.l.b16 %v1038
    %v1220 = vunpack.c.h.b16 %v1038
    %v1221 = vunpack.c.l.b16 %v1039
    %v1222 = vunpack.c.h.b16 %v1039
    %v1223 = vunpack.c.l.b16 %v1040
    %v1224 = vunpack.c.h.b16 %v1040
    %v1225 = vunpack.c.l.b16 %v1041
    %v1226 = vunpack.c.h.b16 %v1041
    %v1227 = vunpack.c.l.b16 %v1042
    %v1228 = vunpack.c.h.b16 %v1042
    %v1229 = vunpack.c.l.b16 %v1043
    %v1230 = vunpack.c.h.b16 %v1043
    %v1231 = vunpack.c.l.b16 %v1044
    %v1232 = vunpack.c.h.b16 %v1044
    %v1233 = vunpack.c.l.b16 %v1045
    %v1234 = vunpack.c.h.b16 %v1045
    %v1235 = vunpack.c.l.b16 %v1046
    %v1236 = vunpack.c.h.b16 %v1046
    %v1237 = vunpack.c.l.b16 %v1047
    %v1238 = vunpack.c.h.b16 %v1047
    %v1239 = vunpack.c.l.b16 %v1048
    %v1240 = vunpack.c.h.b16 %v1048
    %v1241 = vpack.c.b16 %v1117, %v1113
    %v1242 = vpack.c.b16 %v1118, %v1114
    %v1243 = vpack.c.b16 %v1119, %v1115
    %v1244 = vpack.c.b16 %v1120, %v1116
    %v1245 = vpack.c.b16 %v1125, %v1121
    %v1246 = vpack.c.b16 %v1126, %v1122
    %v1247 = vpack.c.b16 %v1127, %v1123
    %v1248 = vpack.c.b16 %v1128, %v1124
    %v1249 = vpack.c.b16 %v1133, %v1129
    %v1250 = vpack.c.b16 %v1134, %v1130
    %v1251 = vpack.c.b16 %v1135, %v1131
    %v1252 = vpack.c.b16 %v1136, %v1132
    %v1253 = vpack.c.b16 %v1141, %v1137
    %v1254 = vpack.c.b16 %v1142, %v1138
    %v1255 = vpack.c.b16 %v1143, %v1139
    %v1256 = vpack.c.b16 %v1144, %v1140
    %v1257 = vpack.c.b16 %v1149, %v1145
    %v1258 = vpack.c.b16 %v1150, %v1146
    %v1259 = vpack.c.b16 %v1151, %v1147
    %v1260 = vpack.c.b16 %v1152, %v1148
    %v1261 = vpack.c.b16 %v1157, %v1153
    %v1262 = vpack.c.b16 %v1158, %v1154
    %v1263 = vpack.c.b16 %v1159, %v1155
    %v1264 = vpack.c.b16 %v1160, %v1156
    %v1265 = vpack.c.b16 %v1165, %v1161
    %v1266 = vpack.c.b16 %v1166, %v1162
    %v1267 = vpack.c.b16 %v1167, %v1163
    %v1268 = vpack.c.b16 %v1168, %v1164
    %v1269 = vpack.c.b16 %v1173, %v1169
    %v1270 = vpack.c.b16 %v1174, %v1170
    %v1271 = vpack.c.b16 %v1175, %v1171
    %v1272 = vpack.c.b16 %v1176, %v1172
    %v1273 = vpack.c.b16 %v1181, %v1177
    %v1274 = vpack.c.b16 %v1182, %v1178
    %v1275 = vpack.c.b16 %v1183, %v1179
    %v1276 = vpack.c.b16 %v1184, %v1180
    %v1277 = vpack.c.b16 %v1189, %v1185
    %v1278 = vpack.c.b16 %v1190, %v1186
    %v1279 = vpack.c.b16 %v1191, %v1187
    %v1280 = vpack.c.b16 %v1192, %v1188
    %v1281 = vpack.c.b16 %v1197, %v1193
    %v1282 = vpack.c.b16 %v1198, %v1194
    %v1283 = vpack.c.b16 %v1199, %v1195
    %v1284 = vpack.c.b16 %v1200, %v1196
    %v1285 = vpack.c.b16 %v1205, %v1201
    %v1286 = vpack.c.b16 %v1206, %v1202
    %v1287 = vpack.c.b16 %v1207, %v1203
    %v1288 = vpack.c.b16 %v1208, %v1204
    %v1289 = vpack.c.b16 %v1213, %v1209
    %v1290 = vpack.c.b16 %v1214, %v1210
    %v1291 = vpack.c.b16 %v1215, %v1211
    %v1292 = vpack.c.b16 %v1216, %v1212
    %v1293 = vpack.c.b16 %v1221, %v1217
    %v1294 = vpack.c.b16 %v1222, %v1218
    %v1295 = vpack.c.b16 %v1223, %v1219
    %v1296 = vpack.c.b16 %v1224, %v1220
    %v1297 = vpack.c.b16 %v1229, %v1225
    %v1298 = vpack.c.b16 %v1230, %v1226
    %v1299 = vpack.c.b16 %v1231, %v1227
    %v1300 = vpack.c.b16 %v1232, %v1228
    %v1301 = vpack.c.b16 %v1237, %v1233
    %v1302 = vpack.c.b16 %v1238, %v1234
    %v1303 = vpack.c.b16 %v1239, %v1235
    %v1304 = vpack.c.b16 %v1240, %v1236
    %1369 = vmatprep.subr.bf16.mxu0 %v1242
    %1370 = vmatpush1.bf16.msra.mxu0 %v1241
    %1371 = vmatprep.subr.bf16.mxu0 %v1246
    %1372 = vmatpush1.bf16.msra.mxu0 %v1245
    %1373 = vmatprep.subr.bf16.mxu0 %v1250
    %1374 = vmatpush1.bf16.msra.mxu0 %v1249
    %1375 = vmatprep.subr.bf16.mxu0 %v1254
    %1376 = vmatpush1.bf16.msra.mxu0 %v1253
    %1377 = vmatprep.subr.bf16.mxu0 %v1258
    %1378 = vmatpush1.bf16.msra.mxu0 %v1257
    %1379 = vmatprep.subr.bf16.mxu0 %v1262
    %1380 = vmatpush1.bf16.msra.mxu0 %v1261
    %1381 = vmatprep.subr.bf16.mxu0 %v1266
    %1382 = vmatpush1.bf16.msra.mxu0 %v1265
    %1383 = vmatprep.subr.bf16.mxu0 %v1270
    %1384 = vmatpush1.bf16.msra.mxu0 %v1269
    %1385 = vmatprep.subr.bf16.mxu0 %v1274
    %1386 = vmatpush1.bf16.msra.mxu0 %v1273
    %1387 = vmatprep.subr.bf16.mxu0 %v1278
    %1388 = vmatpush1.bf16.msra.mxu0 %v1277
    %1389 = vmatprep.subr.bf16.mxu0 %v1282
    %1390 = vmatpush1.bf16.msra.mxu0 %v1281
    %1391 = vmatprep.subr.bf16.mxu0 %v1286
    %1392 = vmatpush1.bf16.msra.mxu0 %v1285
    %1393 = vmatprep.subr.bf16.mxu0 %v1290
    %1394 = vmatpush1.bf16.msra.mxu0 %v1289
    %1395 = vmatprep.subr.bf16.mxu0 %v1294
    %1396 = vmatpush1.bf16.msra.mxu0 %v1293
    %1397 = vmatprep.subr.bf16.mxu0 %v1298
    %1398 = vmatpush1.bf16.msra.mxu0 %v1297
    %1399 = vmatprep.subr.bf16.mxu0 %v1302
    %1400 = vmatpush1.bf16.msra.mxu0 %v1301
    %1401 = vmatprep.mubr.bf16.mxu0 %v984
    %1402 = vmatmul.mubr.bf16.gmra.mrb[0].mxu0 %v983
    %v1403 = vpop.f32.mrb[0].mxu0
    %v1404 = vadd.f32 0.0, %v1403
    %v1405 = vpop.f32.mrb[0].mxu0
    %v1406 = vadd.f32 0.0, %v1405
    %v1407 = vpop.f32.mrb[0].mxu0
    %v1408 = vpop.f32.mrb[0].mxu0
    %1409 = vdwg.mxu0
    %1410 = vmatprep.subr.bf16.mxu0 %v1244
    %1411 = vmatpush1.bf16.msra.mxu0 %v1243
    %1412 = vmatprep.subr.bf16.mxu0 %v1248
    %1413 = vmatpush1.bf16.msra.mxu0 %v1247
    %1414 = vmatprep.subr.bf16.mxu0 %v1252
    %1415 = vmatpush1.bf16.msra.mxu0 %v1251
    %1416 = vmatprep.subr.bf16.mxu0 %v1256
    %1417 = vmatpush1.bf16.msra.mxu0 %v1255
    %1418 = vmatprep.subr.bf16.mxu0 %v1260
    %1419 = vmatpush1.bf16.msra.mxu0 %v1259
    %1420 = vmatprep.subr.bf16.mxu0 %v1264
    %1421 = vmatpush1.bf16.msra.mxu0 %v1263
    %1422 = vmatprep.subr.bf16.mxu0 %v1268
    %1423 = vmatpush1.bf16.msra.mxu0 %v1267
    %1424 = vmatprep.subr.bf16.mxu0 %v1272
    %1425 = vmatpush1.bf16.msra.mxu0 %v1271
    %1426 = vmatprep.subr.bf16.mxu0 %v1276
    %1427 = vmatpush1.bf16.msra.mxu0 %v1275
    %1428 = vmatprep.subr.bf16.mxu0 %v1280
    %1429 = vmatpush1.bf16.msra.mxu0 %v1279
    %1430 = vmatprep.subr.bf16.mxu0 %v1284
    %1431 = vmatpush1.bf16.msra.mxu0 %v1283
    %1432 = vmatprep.subr.bf16.mxu0 %v1288
    %1433 = vmatpush1.bf16.msra.mxu0 %v1287
    %1434 = vmatprep.subr.bf16.mxu0 %v1292
    %1435 = vmatpush1.bf16.msra.mxu0 %v1291
    %1436 = vmatprep.subr.bf16.mxu0 %v1296
    %1437 = vmatpush1.bf16.msra.mxu0 %v1295
    %1438 = vmatprep.subr.bf16.mxu0 %v1300
    %1439 = vmatpush1.bf16.msra.mxu0 %v1299
    %1440 = vmatprep.subr.bf16.mxu0 %v1304
    %1441 = vmatpush1.bf16.msra.mxu0 %v1303
    %1442 = vmatprep.mubr.bf16.mxu0 %v984
    %1443 = vmatmul.mubr.bf16.gmra.mrb[0].mxu0 %v983
    %v1444 = vpop.f32.mrb[0].mxu0
    %v1445 = vadd.f32 0.0, %v1444
    %v1446 = vpop.f32.mrb[0].mxu0
    %v1447 = vadd.f32 0.0, %v1446
    %v1448 = vpop.f32.mrb[0].mxu0
    %v1449 = vpop.f32.mrb[0].mxu0
    %1450 = vdwg.mxu0
    %v1451 = vld [vmem:[%s16] sm:$0xff]
    %v1452 = vld [vmem:[%s16 + $0x8] sm:$0xff]
    %v1453 = vld [vmem:[%s16 + $0x10] sm:$0xff]
    %v1454 = vld [vmem:[%s16 + $0x18] sm:$0xff]
    %v1455 = vld [vmem:[%s16 + $0x20] sm:$0xff]
    %v1456 = vld [vmem:[%s16 + $0x28] sm:$0xff]
    %v1457 = vld [vmem:[%s16 + $0x30] sm:$0xff]
    %v1458 = vld [vmem:[%s16 + $0x38] sm:$0xff]
    %v1459 = vld [vmem:[%s16 + $0x40] sm:$0xff]
    %v1460 = vld [vmem:[%s16 + $0x48] sm:$0xff]
    %v1461 = vld [vmem:[%s16 + $0x50] sm:$0xff]
    %v1462 = vld [vmem:[%s16 + $0x58] sm:$0xff]
    %v1463 = vld [vmem:[%s16 + $0x60] sm:$0xff]
    %v1464 = vld [vmem:[%s16 + $0x68] sm:$0xff]
    %v1465 = vld [vmem:[%s16 + $0x70] sm:$0xff]
    %v1466 = vld [vmem:[%s16 + $0x78] sm:$0xff]
    %v1467 = vld [vmem:[%s16 + $0x80] sm:$0xff]
    %v1468 = vld [vmem:[%s16 + $0x88] sm:$0xff]
    %v1469 = vld [vmem:[%s16 + $0x90] sm:$0xff]
    %v1470 = vld [vmem:[%s16 + $0x98] sm:$0xff]
    %v1471 = vld [vmem:[%s16 + $0xa0] sm:$0xff]
    %v1472 = vld [vmem:[%s16 + $0xa8] sm:$0xff]
    %v1473 = vld [vmem:[%s16 + $0xb0] sm:$0xff]
    %v1474 = vld [vmem:[%s16 + $0xb8] sm:$0xff]
    %v1475 = vld [vmem:[%s16 + $0xc0] sm:$0xff]
    %v1476 = vld [vmem:[%s16 + $0xc8] sm:$0xff]
    %v1477 = vld [vmem:[%s16 + $0xd0] sm:$0xff]
    %v1478 = vld [vmem:[%s16 + $0xd8] sm:$0xff]
    %v1479 = vld [vmem:[%s16 + $0xe0] sm:$0xff]
    %v1480 = vld [vmem:[%s16 + $0xe8] sm:$0xff]
    %v1481 = vld [vmem:[%s16 + $0xf0] sm:$0xff]
    %v1482 = vld [vmem:[%s16 + $0xf8] sm:$0xff]
    %v1483 = vld [vmem:[%s16 + $0x100] sm:$0xff]
    %v1484 = vld [vmem:[%s16 + $0x108] sm:$0xff]
    %v1485 = vld [vmem:[%s16 + $0x110] sm:$0xff]
    %v1486 = vld [vmem:[%s16 + $0x118] sm:$0xff]
    %v1487 = vld [vmem:[%s16 + $0x120] sm:$0xff]
    %v1488 = vld [vmem:[%s16 + $0x128] sm:$0xff]
    %v1489 = vld [vmem:[%s16 + $0x130] sm:$0xff]
    %v1490 = vld [vmem:[%s16 + $0x138] sm:$0xff]
    %v1491 = vld [vmem:[%s16 + $0x140] sm:$0xff]
    %v1492 = vld [vmem:[%s16 + $0x148] sm:$0xff]
    %v1493 = vld [vmem:[%s16 + $0x150] sm:$0xff]
    %v1494 = vld [vmem:[%s16 + $0x158] sm:$0xff]
    %v1495 = vld [vmem:[%s16 + $0x160] sm:$0xff]
    %v1496 = vld [vmem:[%s16 + $0x168] sm:$0xff]
    %v1497 = vld [vmem:[%s16 + $0x170] sm:$0xff]
    %v1498 = vld [vmem:[%s16 + $0x178] sm:$0xff]
    %v1499 = vld [vmem:[%s16 + $0x180] sm:$0xff]
    %v1500 = vld [vmem:[%s16 + $0x188] sm:$0xff]
    %v1501 = vld [vmem:[%s16 + $0x190] sm:$0xff]
    %v1502 = vld [vmem:[%s16 + $0x198] sm:$0xff]
    %v1503 = vld [vmem:[%s16 + $0x1a0] sm:$0xff]
    %v1504 = vld [vmem:[%s16 + $0x1a8] sm:$0xff]
    %v1505 = vld [vmem:[%s16 + $0x1b0] sm:$0xff]
    %v1506 = vld [vmem:[%s16 + $0x1b8] sm:$0xff]
    %v1507 = vld [vmem:[%s16 + $0x1c0] sm:$0xff]
    %v1508 = vld [vmem:[%s16 + $0x1c8] sm:$0xff]
    %v1509 = vld [vmem:[%s16 + $0x1d0] sm:$0xff]
    %v1510 = vld [vmem:[%s16 + $0x1d8] sm:$0xff]
    %v1511 = vld [vmem:[%s16 + $0x1e0] sm:$0xff]
    %v1512 = vld [vmem:[%s16 + $0x1e8] sm:$0xff]
    %v1513 = vld [vmem:[%s16 + $0x1f0] sm:$0xff]
    %v1514 = vld [vmem:[%s16 + $0x1f8] sm:$0xff]
    %s1515 = smul.u32 %s172, 64
    %s1516 = scvt.s32.f32 %s1515
    %v1517 = vmul.f32 %v1404, %v178
    %v1518 = vmul.f32 %v1406, %v178
    %v1519 = vmul.f32 %v1445, %v178
    %v1520 = vmul.f32 %v1447, %v178
    %v1521 = vrot.slane %v1517, 4
    %v1522 = vadd.f32 %v1517, %v1521
    %v1523 = vrot.slane %v1522, 2
    %v1524 = vadd.f32 %v1522, %v1523
    %v1525 = vrot.slane %v1524, 1
    %v1526 = vadd.f32 %v1524, %v1525
    %v1527 = vrot.slane %v1518, 4
    %v1528 = vadd.f32 %v1518, %v1527
    %v1529 = vrot.slane %v1528, 2
    %v1530 = vadd.f32 %v1528, %v1529
    %v1531 = vrot.slane %v1530, 1
    %v1532 = vadd.f32 %v1530, %v1531
    %v1533 = vrot.slane %v1519, 4
    %v1534 = vadd.f32 %v1519, %v1533
    %v1535 = vrot.slane %v1534, 2
    %v1536 = vadd.f32 %v1534, %v1535
    %v1537 = vrot.slane %v1536, 1
    %v1538 = vadd.f32 %v1536, %v1537
    %v1539 = vrot.slane %v1520, 4
    %v1540 = vadd.f32 %v1520, %v1539
    %v1541 = vrot.slane %v1540, 2
    %v1542 = vadd.f32 %v1540, %v1541
    %v1543 = vrot.slane %v1542, 1
    %v1544 = vadd.f32 %v1542, %v1543
    %v1545 = vmul.f32 %v1517, %v1404
    %v1546 = vmul.f32 %v1518, %v1406
    %v1547 = vmul.f32 %v1519, %v1445
    %v1548 = vmul.f32 %v1520, %v1447
    %v1549 = vrot.slane %v1545, 4
    %v1550 = vadd.f32 %v1545, %v1549
    %v1551 = vrot.slane %v1550, 2
    %v1552 = vadd.f32 %v1550, %v1551
    %v1553 = vrot.slane %v1552, 1
    %v1554 = vadd.f32 %v1552, %v1553
    %v1555 = vrot.slane %v1546, 4
    %v1556 = vadd.f32 %v1546, %v1555
    %v1557 = vrot.slane %v1556, 2
    %v1558 = vadd.f32 %v1556, %v1557
    %v1559 = vrot.slane %v1558, 1
    %v1560 = vadd.f32 %v1558, %v1559
    %v1561 = vrot.slane %v1547, 4
    %v1562 = vadd.f32 %v1547, %v1561
    %v1563 = vrot.slane %v1562, 2
    %v1564 = vadd.f32 %v1562, %v1563
    %v1565 = vrot.slane %v1564, 1
    %v1566 = vadd.f32 %v1564, %v1565
    %v1567 = vrot.slane %v1548, 4
    %v1568 = vadd.f32 %v1548, %v1567
    %v1569 = vrot.slane %v1568, 2
    %v1570 = vadd.f32 %v1568, %v1569
    %v1571 = vrot.slane %v1570, 1
    %v1572 = vadd.f32 %v1570, %v1571
    %v1573 = vsel %vm355, %v1526, %v1554
    %v1574 = vsel %vm355, %v1532, %v1560
    %v1575 = vsel %vm355, %v1538, %v1566
    %v1576 = vsel %vm355, %v1544, %v1572
    %1577 = vmatprep.subr.mxu0 0.0
    %1578 = vmatpush1.msra.mxu0 %v1451
    %1579 = vmatprep.subr.mxu0 0.0
    %1580 = vmatpush1.msra.mxu0 %v1452
    %1581 = vmatprep.subr.mxu0 0.0
    %1582 = vmatpush1.msra.mxu0 %v1453
    %1583 = vmatprep.subr.mxu0 0.0
    %1584 = vmatpush1.msra.mxu0 %v1454
    %1585 = vmatprep.subr.mxu0 0.0
    %1586 = vmatpush1.msra.mxu0 %v1455
    %1587 = vmatprep.subr.mxu0 0.0
    %1588 = vmatpush1.msra.mxu0 %v1456
    %1589 = vmatprep.subr.mxu0 0.0
    %1590 = vmatpush1.msra.mxu0 %v1457
    %1591 = vmatprep.subr.mxu0 0.0
    %1592 = vmatpush1.msra.mxu0 %v1458
    %1593 = vmatprep.subr.mxu0 0.0
    %1594 = vmatpush1.msra.mxu0 %v1459
    %1595 = vmatprep.subr.mxu0 0.0
    %1596 = vmatpush1.msra.mxu0 %v1460
    %1597 = vmatprep.subr.mxu0 0.0
    %1598 = vmatpush1.msra.mxu0 %v1461
    %1599 = vmatprep.subr.mxu0 0.0
    %1600 = vmatpush1.msra.mxu0 %v1462
    %1601 = vmatprep.subr.mxu0 0.0
    %1602 = vmatpush1.msra.mxu0 %v1463
    %1603 = vmatprep.subr.mxu0 0.0
    %1604 = vmatpush1.msra.mxu0 %v1464
    %1605 = vmatprep.subr.mxu0 0.0
    %1606 = vmatpush1.msra.mxu0 %v1465
    %1607 = vmatprep.subr.mxu0 0.0
    %1608 = vmatpush1.msra.mxu0 %v1466
    %1609 = vmatprep.subr.mxu0 0.0
    %1610 = vmatpush1.msra.mxu0 %v1467
    %1611 = vmatprep.subr.mxu0 0.0
    %1612 = vmatpush1.msra.mxu0 %v1468
    %1613 = vmatprep.subr.mxu0 0.0
    %1614 = vmatpush1.msra.mxu0 %v1469
    %1615 = vmatprep.subr.mxu0 0.0
    %1616 = vmatpush1.msra.mxu0 %v1470
    %1617 = vmatprep.subr.mxu0 0.0
    %1618 = vmatpush1.msra.mxu0 %v1471
    %1619 = vmatprep.subr.mxu0 0.0
    %1620 = vmatpush1.msra.mxu0 %v1472
    %1621 = vmatprep.subr.mxu0 0.0
    %1622 = vmatpush1.msra.mxu0 %v1473
    %1623 = vmatprep.subr.mxu0 0.0
    %1624 = vmatpush1.msra.mxu0 %v1474
    %1625 = vmatprep.subr.mxu0 0.0
    %1626 = vmatpush1.msra.mxu0 %v1475
    %1627 = vmatprep.subr.mxu0 0.0
    %1628 = vmatpush1.msra.mxu0 %v1476
    %1629 = vmatprep.subr.mxu0 0.0
    %1630 = vmatpush1.msra.mxu0 %v1477
    %1631 = vmatprep.subr.mxu0 0.0
    %1632 = vmatpush1.msra.mxu0 %v1478
    %1633 = vmatprep.subr.mxu0 0.0
    %1634 = vmatpush1.msra.mxu0 %v1479
    %1635 = vmatprep.subr.mxu0 0.0
    %1636 = vmatpush1.msra.mxu0 %v1480
    %1637 = vmatprep.subr.mxu0 0.0
    %1638 = vmatpush1.msra.mxu0 %v1481
    %1639 = vmatprep.subr.mxu0 0.0
    %1640 = vmatpush1.msra.mxu0 %v1482
    %1641 = vmatprep.mubr.f32.mxu0 %v1574
    %1642 = vmatmul.mubr.f32.gmra.mrb[0].mxu0 %v1573
    %v1643 = vpop.f32.mrb[0].mxu0
    %v1644 = vadd.f32 0.0, %v1643
    %v1645 = vpop.f32.mrb[0].mxu0
    %1646 = vdwg.mxu0
    %1647 = vmatprep.subr.mxu0 0.0
    %1648 = vmatpush1.msra.mxu0 %v1483
    %1649 = vmatprep.subr.mxu0 0.0
    %1650 = vmatpush1.msra.mxu0 %v1484
    %1651 = vmatprep.subr.mxu0 0.0
    %1652 = vmatpush1.msra.mxu0 %v1485
    %1653 = vmatprep.subr.mxu0 0.0
    %1654 = vmatpush1.msra.mxu0 %v1486
    %1655 = vmatprep.subr.mxu0 0.0
    %1656 = vmatpush1.msra.mxu0 %v1487
    %1657 = vmatprep.subr.mxu0 0.0
    %1658 = vmatpush1.msra.mxu0 %v1488
    %1659 = vmatprep.subr.mxu0 0.0
    %1660 = vmatpush1.msra.mxu0 %v1489
    %1661 = vmatprep.subr.mxu0 0.0
    %1662 = vmatpush1.msra.mxu0 %v1490
    %1663 = vmatprep.subr.mxu0 0.0
    %1664 = vmatpush1.msra.mxu0 %v1491
    %1665 = vmatprep.subr.mxu0 0.0
    %1666 = vmatpush1.msra.mxu0 %v1492
    %1667 = vmatprep.subr.mxu0 0.0
    %1668 = vmatpush1.msra.mxu0 %v1493
    %1669 = vmatprep.subr.mxu0 0.0
    %1670 = vmatpush1.msra.mxu0 %v1494
    %1671 = vmatprep.subr.mxu0 0.0
    %1672 = vmatpush1.msra.mxu0 %v1495
    %1673 = vmatprep.subr.mxu0 0.0
    %1674 = vmatpush1.msra.mxu0 %v1496
    %1675 = vmatprep.subr.mxu0 0.0
    %1676 = vmatpush1.msra.mxu0 %v1497
    %1677 = vmatprep.subr.mxu0 0.0
    %1678 = vmatpush1.msra.mxu0 %v1498
    %1679 = vmatprep.subr.mxu0 0.0
    %1680 = vmatpush1.msra.mxu0 %v1499
    %1681 = vmatprep.subr.mxu0 0.0
    %1682 = vmatpush1.msra.mxu0 %v1500
    %1683 = vmatprep.subr.mxu0 0.0
    %1684 = vmatpush1.msra.mxu0 %v1501
    %1685 = vmatprep.subr.mxu0 0.0
    %1686 = vmatpush1.msra.mxu0 %v1502
    %1687 = vmatprep.subr.mxu0 0.0
    %1688 = vmatpush1.msra.mxu0 %v1503
    %1689 = vmatprep.subr.mxu0 0.0
    %1690 = vmatpush1.msra.mxu0 %v1504
    %1691 = vmatprep.subr.mxu0 0.0
    %1692 = vmatpush1.msra.mxu0 %v1505
    %1693 = vmatprep.subr.mxu0 0.0
    %1694 = vmatpush1.msra.mxu0 %v1506
    %1695 = vmatprep.subr.mxu0 0.0
    %1696 = vmatpush1.msra.mxu0 %v1507
    %1697 = vmatprep.subr.mxu0 0.0
    %1698 = vmatpush1.msra.mxu0 %v1508
    %1699 = vmatprep.subr.mxu0 0.0
    %1700 = vmatpush1.msra.mxu0 %v1509
    %1701 = vmatprep.subr.mxu0 0.0
    %1702 = vmatpush1.msra.mxu0 %v1510
    %1703 = vmatprep.subr.mxu0 0.0
    %1704 = vmatpush1.msra.mxu0 %v1511
    %1705 = vmatprep.subr.mxu0 0.0
    %1706 = vmatpush1.msra.mxu0 %v1512
    %1707 = vmatprep.subr.mxu0 0.0
    %1708 = vmatpush1.msra.mxu0 %v1513
    %1709 = vmatprep.subr.mxu0 0.0
    %1710 = vmatpush1.msra.mxu0 %v1514
    %1711 = vmatprep.mubr.f32.mxu0 %v1576
    %1712 = vmatmul.mubr.f32.gmra.mrb[0].mxu0 %v1575
    %v1713 = vpop.f32.mrb[0].mxu0
    %v1714 = vadd.f32 %v1644, %v1713
    %v1715 = vpop.f32.mrb[0].mxu0
    %1716 = vdwg.mxu0
    %v1717 = vstv %s1516
    %v1718 = vrcp.pop %v1717
    %v1719 = vmul.f32 %v1714, %v1718
    %v1720 = vmul.f32 %v1719, %v1719
    %v1722 = vrot.slane %v1720, 7
    %v1724 = vsub.f32 %v1719, %v1722
    %v1725 = vmax.f32 %v1724, 0.0
    %v1726 = vld [vmem:[%s14] sm:$0x1]
    %v1727 = vadd.f32 %v1725, 1e-05
    %v1728 = vrsqrt.pop %v1727
    %v1731 = vunpack.c.l.s4 1966171168
    %v1732 = vunpack.c.0.s8 %v1731
    %v1733 = vlaneseq
    %v1734 = vshrl.u32 %v1733, 7
    %v1735 = vsub.s32 %v1732, %v1734
    %v1736 = vrot.slane %v1728, %v1735
    %v1737 = vcombine.high %v1736, %v1736
    %v1739 = vunpack.c.l.s4 1966171168
    %v1740 = vunpack.c.0.s8 %v1739
    %v1741 = vlaneseq
    %v1742 = vshrl.u32 %v1741, 7
    %v1743 = vsub.s32 %v1740, %v1742
    %v1744 = vrot.slane %v1737, %v1743
    %v1746 = vmul.f32 %v1726, %v1744
    %v1747 = vld [vmem:[%s15] sm:$0x1]
    %v1748 = vmul.f32 %v1719, %v1746
    %v1749 = vsub.f32 %v1747, %v1748
    %v1751 = vlaneseq
    %v1752 = vshrl.u32 %v1751, 7
    %v1753 = vsub.s32 0, %v1752
    %v1754 = vrot.slane %v1749, %v1753
    %v1756 = vsel %vm355, %v1746, %v1754
    %v1757 = vld [vmem:[#allocation13] sm:$0xff]
    %v1758 = vld [vmem:[#allocation13 + $0x8] sm:$0xff]
    %v1759 = vld [vmem:[#allocation13 + $0x10] sm:$0xff]
    %v1760 = vld [vmem:[#allocation13 + $0x18] sm:$0xff]
    %vm1761 = vcmask 64512
    %v1763 = vsel %vm1761, %v1756, 0
    %1765 = vmatprep.subr.mxu0 %v1758
    %1766 = vmatpush1.msra.mxu0 %v1757
    %1767 = vmatprep.subr.mxu0 0.0
    %1768 = vmatpush1.msra.mxu0 0.0
    %1769 = vmatprep.subr.mxu0 0.0
    %1770 = vmatpush1.msra.mxu0 0.0
    %1771 = vmatprep.subr.mxu0 0.0
    %1772 = vmatpush1.msra.mxu0 0.0
    %1773 = vmatprep.subr.mxu0 0.0
    %1774 = vmatpush1.msra.mxu0 0.0
    %1775 = vmatprep.subr.mxu0 0.0
    %1776 = vmatpush1.msra.mxu0 0.0
    %1777 = vmatprep.subr.mxu0 0.0
    %1778 = vmatpush1.msra.mxu0 0.0
    %1779 = vmatprep.subr.mxu0 0.0
    %1780 = vmatpush1.msra.mxu0 0.0
    %1781 = vmatprep.subr.mxu0 0.0
    %1782 = vmatpush1.msra.mxu0 0.0
    %1783 = vmatprep.subr.mxu0 0.0
    %1784 = vmatpush1.msra.mxu0 0.0
    %1785 = vmatprep.subr.mxu0 0.0
    %1786 = vmatpush1.msra.mxu0 0.0
    %1787 = vmatprep.subr.mxu0 0.0
    %1788 = vmatpush1.msra.mxu0 0.0
    %1789 = vmatprep.subr.mxu0 0.0
    %1790 = vmatpush1.msra.mxu0 0.0
    %1791 = vmatprep.subr.mxu0 0.0
    %1792 = vmatpush1.msra.mxu0 0.0
    %1793 = vmatprep.subr.mxu0 0.0
    %1794 = vmatpush1.msra.mxu0 0.0
    %1795 = vmatprep.subr.mxu0 0.0
    %1796 = vmatpush1.msra.mxu0 0.0
    %1797 = vmatprep.subr.mxu0 0.0
    %1798 = vmatpush1.msra.mxu0 0.0
    %1799 = vmatprep.subr.mxu0 0.0
    %1800 = vmatpush1.msra.mxu0 0.0
    %1801 = vmatprep.subr.mxu0 0.0
    %1802 = vmatpush1.msra.mxu0 0.0
    %1803 = vmatprep.subr.mxu0 0.0
    %1804 = vmatpush1.msra.mxu0 0.0
    %1805 = vmatprep.subr.mxu0 0.0
    %1806 = vmatpush1.msra.mxu0 0.0
    %1807 = vmatprep.subr.mxu0 0.0
    %1808 = vmatpush1.msra.mxu0 0.0
    %1809 = vmatprep.subr.mxu0 0.0
    %1810 = vmatpush1.msra.mxu0 0.0
    %1811 = vmatprep.subr.mxu0 0.0
    %1812 = vmatpush1.msra.mxu0 0.0
    %1813 = vmatprep.subr.mxu0 0.0
    %1814 = vmatpush1.msra.mxu0 0.0
    %1815 = vmatprep.subr.mxu0 0.0
    %1816 = vmatpush1.msra.mxu0 0.0
    %1817 = vmatprep.subr.mxu0 0.0
    %1818 = vmatpush1.msra.mxu0 0.0
    %1819 = vmatprep.subr.mxu0 0.0
    %1820 = vmatpush1.msra.mxu0 0.0
    %1821 = vmatprep.subr.mxu0 0.0
    %1822 = vmatpush1.msra.mxu0 0.0
    %1823 = vmatprep.subr.mxu0 0.0
    %1824 = vmatpush1.msra.mxu0 0.0
    %1825 = vmatprep.subr.mxu0 0.0
    %1826 = vmatpush1.msra.mxu0 0.0
    %1827 = vmatprep.subr.mxu0 0.0
    %1828 = vmatpush1.msra.mxu0 0.0
    %1829 = vmatprep.mubr.f32.mxu0 0.0
    %1830 = vmatmul.mubr.f32.gmra.mrb[0].mxu0 %v1763
    %v1831 = vpop.f32.mrb[0].mxu0
    %v1832 = vadd.f32 0.0, %v1831
    %v1833 = vpop.f32.mrb[0].mxu0
    %v1834 = vadd.f32 0.0, %v1833
    %1835 = vdwg.mxu0
    %1836 = vmatprep.subr.mxu0 %v1760
    %1837 = vmatpush1.msra.mxu0 %v1759
    %1838 = vmatprep.subr.mxu0 0.0
    %1839 = vmatpush1.msra.mxu0 0.0
    %1840 = vmatprep.subr.mxu0 0.0
    %1841 = vmatpush1.msra.mxu0 0.0
    %1842 = vmatprep.subr.mxu0 0.0
    %1843 = vmatpush1.msra.mxu0 0.0
    %1844 = vmatprep.subr.mxu0 0.0
    %1845 = vmatpush1.msra.mxu0 0.0
    %1846 = vmatprep.subr.mxu0 0.0
    %1847 = vmatpush1.msra.mxu0 0.0
    %1848 = vmatprep.subr.mxu0 0.0
    %1849 = vmatpush1.msra.mxu0 0.0
    %1850 = vmatprep.subr.mxu0 0.0
    %1851 = vmatpush1.msra.mxu0 0.0
    %1852 = vmatprep.subr.mxu0 0.0
    %1853 = vmatpush1.msra.mxu0 0.0
    %1854 = vmatprep.subr.mxu0 0.0
    %1855 = vmatpush1.msra.mxu0 0.0
    %1856 = vmatprep.subr.mxu0 0.0
    %1857 = vmatpush1.msra.mxu0 0.0
    %1858 = vmatprep.subr.mxu0 0.0
    %1859 = vmatpush1.msra.mxu0 0.0
    %1860 = vmatprep.subr.mxu0 0.0
    %1861 = vmatpush1.msra.mxu0 0.0
    %1862 = vmatprep.subr.mxu0 0.0
    %1863 = vmatpush1.msra.mxu0 0.0
    %1864 = vmatprep.subr.mxu0 0.0
    %1865 = vmatpush1.msra.mxu0 0.0
    %1866 = vmatprep.subr.mxu0 0.0
    %1867 = vmatpush1.msra.mxu0 0.0
    %1868 = vmatprep.subr.mxu0 0.0
    %1869 = vmatpush1.msra.mxu0 0.0
    %1870 = vmatprep.subr.mxu0 0.0
    %1871 = vmatpush1.msra.mxu0 0.0
    %1872 = vmatprep.subr.mxu0 0.0
    %1873 = vmatpush1.msra.mxu0 0.0
    %1874 = vmatprep.subr.mxu0 0.0
    %1875 = vmatpush1.msra.mxu0 0.0
    %1876 = vmatprep.subr.mxu0 0.0
    %1877 = vmatpush1.msra.mxu0 0.0
    %1878 = vmatprep.subr.mxu0 0.0
    %1879 = vmatpush1.msra.mxu0 0.0
    %1880 = vmatprep.subr.mxu0 0.0
    %1881 = vmatpush1.msra.mxu0 0.0
    %1882 = vmatprep.subr.mxu0 0.0
    %1883 = vmatpush1.msra.mxu0 0.0
    %1884 = vmatprep.subr.mxu0 0.0
    %1885 = vmatpush1.msra.mxu0 0.0
    %1886 = vmatprep.subr.mxu0 0.0
    %1887 = vmatpush1.msra.mxu0 0.0
    %1888 = vmatprep.subr.mxu0 0.0
    %1889 = vmatpush1.msra.mxu0 0.0
    %1890 = vmatprep.subr.mxu0 0.0
    %1891 = vmatpush1.msra.mxu0 0.0
    %1892 = vmatprep.subr.mxu0 0.0
    %1893 = vmatpush1.msra.mxu0 0.0
    %1894 = vmatprep.subr.mxu0 0.0
    %1895 = vmatpush1.msra.mxu0 0.0
    %1896 = vmatprep.subr.mxu0 0.0
    %1897 = vmatpush1.msra.mxu0 0.0
    %1898 = vmatprep.subr.mxu0 0.0
    %1899 = vmatpush1.msra.mxu0 0.0
    %1900 = vmatprep.mubr.f32.mxu0 0.0
    %1901 = vmatmul.mubr.f32.gmra.mrb[0].mxu0 %v1763
    %v1902 = vpop.f32.mrb[0].mxu0
    %v1903 = vadd.f32 0.0, %v1902
    %v1904 = vpop.f32.mrb[0].mxu0
    %v1905 = vadd.f32 0.0, %v1904
    %1906 = vdwg.mxu0
    %v1907 = vlaneseq
    %v1908 = vshrl.u32 %v1907, 7
    %v1909 = vsub.s32 0, %v1908
    %v1910 = vrot.slane %v1832, %v1909
    %v1911 = vlaneseq
    %v1912 = vshrl.u32 %v1911, 7
    %v1913 = vsub.s32 0, %v1912
    %v1914 = vrot.slane %v1834, %v1913
    %v1915 = vlaneseq
    %v1916 = vshrl.u32 %v1915, 7
    %v1917 = vsub.s32 0, %v1916
    %v1918 = vrot.slane %v1903, %v1917
    %v1919 = vlaneseq
    %v1920 = vshrl.u32 %v1919, 7
    %v1921 = vsub.s32 0, %v1920
    %v1922 = vrot.slane %v1905, %v1921
    %v1923 = vmul.f32 %v1404, %v1910
    %v1924 = vmul.f32 %v1406, %v1914
    %v1925 = vmul.f32 %v1445, %v1918
    %v1926 = vmul.f32 %v1447, %v1922
    %v1927 = vlaneseq
    %v1928 = vshrl.u32 %v1927, 7
    %v1929 = vsub.s32 1, %v1928
    %v1930 = vrot.slane %v1832, %v1929
    %v1931 = vlaneseq
    %v1932 = vshrl.u32 %v1931, 7
    %v1933 = vsub.s32 1, %v1932
    %v1934 = vrot.slane %v1834, %v1933
    %v1935 = vlaneseq
    %v1936 = vshrl.u32 %v1935, 7
    %v1937 = vsub.s32 1, %v1936
    %v1938 = vrot.slane %v1903, %v1937
    %v1939 = vlaneseq
    %v1940 = vshrl.u32 %v1939, 7
    %v1941 = vsub.s32 1, %v1940
    %v1942 = vrot.slane %v1905, %v1941
    %v1943 = vadd.f32 %v1923, %v1930
    %v1944 = vadd.f32 %v1924, %v1934
    %v1945 = vadd.f32 %v1925, %v1938
    %v1946 = vadd.f32 %v1926, %v1942
    %vm1947 = vcmp.gt.f32.partialorder %v1943, 0.0
    %vm1948 = vcmp.gt.f32.partialorder %v1944, 0.0
    %vm1949 = vcmp.gt.f32.partialorder %v1945, 0.0
    %vm1950 = vcmp.gt.f32.partialorder %v1946, 0.0
    %v1951 = vmin.f32 %v1943, 0.0
    %v1952 = vmin.f32 %v1944, 0.0
    %v1953 = vmin.f32 %v1945, 0.0
    %v1954 = vmin.f32 %v1946, 0.0
    %v1955 = vmul.f32 %v1951, 1.442695
    %v1956 = vpow.pop %v1955
    %v1957 = vmul.f32 %v1952, 1.442695
    %v1958 = vpow.pop %v1957
    %v1959 = vmul.f32 %v1953, 1.442695
    %v1960 = vpow.pop %v1959
    %v1961 = vmul.f32 %v1954, 1.442695
    %v1962 = vpow.pop %v1961
    %v1963 = vsub.f32 %v1956, 1.0
    %v1964 = vsub.f32 %v1958, 1.0
    %v1965 = vsub.f32 %v1960, 1.0
    %v1966 = vsub.f32 %v1962, 1.0
    %v1967 = vsel %vm1947, %v1943, %v1963
    %v1968 = vsel %vm1948, %v1944, %v1964
    %v1969 = vsel %vm1949, %v1945, %v1965
    %v1970 = vsel %vm1950, %v1946, %v1966
    %v1971 = vpack.c.bf16 %v1967, %v1967
    %v1972 = vpack.c.bf16 %v1968, %v1968
    %v1973 = vpack.c.bf16 %v1969, %v1969
    %v1974 = vpack.c.bf16 %v1970, %v1970
    %v1975 = vld [vmem:[%s18] sm:$0xff]
    %v1976 = vld [vmem:[%s18 + $0x8] sm:$0xff]
    %v1977 = vld [vmem:[%s18 + $0x10] sm:$0xff]
    %v1978 = vld [vmem:[%s18 + $0x18] sm:$0xff]
    %v1979 = vld [vmem:[%s18 + $0x20] sm:$0xff]
    %v1980 = vld [vmem:[%s18 + $0x28] sm:$0xff]
    %v1981 = vld [vmem:[%s18 + $0x30] sm:$0xff]
    %v1982 = vld [vmem:[%s18 + $0x38] sm:$0xff]
    %v1983 = vld [vmem:[%s18 + $0x40] sm:$0xff]
    %v1984 = vld [vmem:[%s18 + $0x48] sm:$0xff]
    %v1985 = vld [vmem:[%s18 + $0x50] sm:$0xff]
    %v1986 = vld [vmem:[%s18 + $0x58] sm:$0xff]
    %v1987 = vld [vmem:[%s18 + $0x60] sm:$0xff]
    %v1988 = vld [vmem:[%s18 + $0x68] sm:$0xff]
    %v1989 = vld [vmem:[%s18 + $0x70] sm:$0xff]
    %v1990 = vld [vmem:[%s18 + $0x78] sm:$0xff]
    %v1991 = vld [vmem:[%s18 + $0x80] sm:$0xff]
    %v1992 = vld [vmem:[%s18 + $0x88] sm:$0xff]
    %v1993 = vld [vmem:[%s18 + $0x90] sm:$0xff]
    %v1994 = vld [vmem:[%s18 + $0x98] sm:$0xff]
    %v1995 = vld [vmem:[%s18 + $0xa0] sm:$0xff]
    %v1996 = vld [vmem:[%s18 + $0xa8] sm:$0xff]
    %v1997 = vld [vmem:[%s18 + $0xb0] sm:$0xff]
    %v1998 = vld [vmem:[%s18 + $0xb8] sm:$0xff]
    %v1999 = vld [vmem:[%s18 + $0xc0] sm:$0xff]
    %v2000 = vld [vmem:[%s18 + $0xc8] sm:$0xff]
    %v2001 = vld [vmem:[%s18 + $0xd0] sm:$0xff]
    %v2002 = vld [vmem:[%s18 + $0xd8] sm:$0xff]
    %v2003 = vld [vmem:[%s18 + $0xe0] sm:$0xff]
    %v2004 = vld [vmem:[%s18 + $0xe8] sm:$0xff]
    %v2005 = vld [vmem:[%s18 + $0xf0] sm:$0xff]
    %v2006 = vld [vmem:[%s18 + $0xf8] sm:$0xff]
    %v2007 = vld [vmem:[%s18 + $0x100] sm:$0xff]
    %v2008 = vld [vmem:[%s18 + $0x108] sm:$0xff]
    %v2009 = vld [vmem:[%s18 + $0x110] sm:$0xff]
    %v2010 = vld [vmem:[%s18 + $0x118] sm:$0xff]
    %v2011 = vld [vmem:[%s18 + $0x120] sm:$0xff]
    %v2012 = vld [vmem:[%s18 + $0x128] sm:$0xff]
    %v2013 = vld [vmem:[%s18 + $0x130] sm:$0xff]
    %v2014 = vld [vmem:[%s18 + $0x138] sm:$0xff]
    %v2015 = vld [vmem:[%s18 + $0x140] sm:$0xff]
    %v2016 = vld [vmem:[%s18 + $0x148] sm:$0xff]
    %v2017 = vld [vmem:[%s18 + $0x150] sm:$0xff]
    %v2018 = vld [vmem:[%s18 + $0x158] sm:$0xff]
    %v2019 = vld [vmem:[%s18 + $0x160] sm:$0xff]
    %v2020 = vld [vmem:[%s18 + $0x168] sm:$0xff]
    %v2021 = vld [vmem:[%s18 + $0x170] sm:$0xff]
    %v2022 = vld [vmem:[%s18 + $0x178] sm:$0xff]
    %v2023 = vld [vmem:[%s18 + $0x180] sm:$0xff]
    %v2024 = vld [vmem:[%s18 + $0x188] sm:$0xff]
    %v2025 = vld [vmem:[%s18 + $0x190] sm:$0xff]
    %v2026 = vld [vmem:[%s18 + $0x198] sm:$0xff]
    %v2027 = vld [vmem:[%s18 + $0x1a0] sm:$0xff]
    %v2028 = vld [vmem:[%s18 + $0x1a8] sm:$0xff]
    %v2029 = vld [vmem:[%s18 + $0x1b0] sm:$0xff]
    %v2030 = vld [vmem:[%s18 + $0x1b8] sm:$0xff]
    %v2031 = vld [vmem:[%s18 + $0x1c0] sm:$0xff]
    %v2032 = vld [vmem:[%s18 + $0x1c8] sm:$0xff]
    %v2033 = vld [vmem:[%s18 + $0x1d0] sm:$0xff]
    %v2034 = vld [vmem:[%s18 + $0x1d8] sm:$0xff]
    %v2035 = vld [vmem:[%s18 + $0x1e0] sm:$0xff]
    %v2036 = vld [vmem:[%s18 + $0x1e8] sm:$0xff]
    %v2037 = vld [vmem:[%s18 + $0x1f0] sm:$0xff]
    %v2038 = vld [vmem:[%s18 + $0x1f8] sm:$0xff]
    %v2039 = vld [vmem:[%s19] sm:$0x3]
    %v2041 = vlaneseq
    %v2042 = vshrl.u32 %v2041, 7
    %v2043 = vsub.s32 0, %v2042
    %v2044 = vrot.slane %v2039, %v2043
    %v2045 = vlaneseq
    %v2046 = vshrl.u32 %v2045, 7
    %v2047 = vsub.s32 1, %v2046
    %v2048 = vrot.slane %v2039, %v2047
    %v2115 = vunpack.c.l.b16 %v1975
    %v2116 = vunpack.c.h.b16 %v1975
    %v2117 = vunpack.c.l.b16 %v1976
    %v2118 = vunpack.c.h.b16 %v1976
    %v2119 = vunpack.c.l.b16 %v1977
    %v2120 = vunpack.c.h.b16 %v1977
    %v2121 = vunpack.c.l.b16 %v1978
    %v2122 = vunpack.c.h.b16 %v1978
    %v2123 = vunpack.c.l.b16 %v1979
    %v2124 = vunpack.c.h.b16 %v1979
    %v2125 = vunpack.c.l.b16 %v1980
    %v2126 = vunpack.c.h.b16 %v1980
    %v2127 = vunpack.c.l.b16 %v1981
    %v2128 = vunpack.c.h.b16 %v1981
    %v2129 = vunpack.c.l.b16 %v1982
    %v2130 = vunpack.c.h.b16 %v1982
    %v2131 = vunpack.c.l.b16 %v1983
    %v2132 = vunpack.c.h.b16 %v1983
    %v2133 = vunpack.c.l.b16 %v1984
    %v2134 = vunpack.c.h.b16 %v1984
    %v2135 = vunpack.c.l.b16 %v1985
    %v2136 = vunpack.c.h.b16 %v1985
    %v2137 = vunpack.c.l.b16 %v1986
    %v2138 = vunpack.c.h.b16 %v1986
    %v2139 = vunpack.c.l.b16 %v1987
    %v2140 = vunpack.c.h.b16 %v1987
    %v2141 = vunpack.c.l.b16 %v1988
    %v2142 = vunpack.c.h.b16 %v1988
    %v2143 = vunpack.c.l.b16 %v1989
    %v2144 = vunpack.c.h.b16 %v1989
    %v2145 = vunpack.c.l.b16 %v1990
    %v2146 = vunpack.c.h.b16 %v1990
    %v2147 = vunpack.c.l.b16 %v1991
    %v2148 = vunpack.c.h.b16 %v1991
    %v2149 = vunpack.c.l.b16 %v1992
    %v2150 = vunpack.c.h.b16 %v1992
    %v2151 = vunpack.c.l.b16 %v1993
    %v2152 = vunpack.c.h.b16 %v1993
    %v2153 = vunpack.c.l.b16 %v1994
    %v2154 = vunpack.c.h.b16 %v1994
    %v2155 = vunpack.c.l.b16 %v1995
    %v2156 = vunpack.c.h.b16 %v1995
    %v2157 = vunpack.c.l.b16 %v1996
    %v2158 = vunpack.c.h.b16 %v1996
    %v2159 = vunpack.c.l.b16 %v1997
    %v2160 = vunpack.c.h.b16 %v1997
    %v2161 = vunpack.c.l.b16 %v1998
    %v2162 = vunpack.c.h.b16 %v1998
    %v2163 = vunpack.c.l.b16 %v1999
    %v2164 = vunpack.c.h.b16 %v1999
    %v2165 = vunpack.c.l.b16 %v2000
    %v2166 = vunpack.c.h.b16 %v2000
    %v2167 = vunpack.c.l.b16 %v2001
    %v2168 = vunpack.c.h.b16 %v2001
    %v2169 = vunpack.c.l.b16 %v2002
    %v2170 = vunpack.c.h.b16 %v2002
    %v2171 = vunpack.c.l.b16 %v2003
    %v2172 = vunpack.c.h.b16 %v2003
    %v2173 = vunpack.c.l.b16 %v2004
    %v2174 = vunpack.c.h.b16 %v2004
    %v2175 = vunpack.c.l.b16 %v2005
    %v2176 = vunpack.c.h.b16 %v2005
    %v2177 = vunpack.c.l.b16 %v2006
    %v2178 = vunpack.c.h.b16 %v2006
    %v2179 = vunpack.c.l.b16 %v2007
    %v2180 = vunpack.c.h.b16 %v2007
    %v2181 = vunpack.c.l.b16 %v2008
    %v2182 = vunpack.c.h.b16 %v2008
    %v2183 = vunpack.c.l.b16 %v2009
    %v2184 = vunpack.c.h.b16 %v2009
    %v2185 = vunpack.c.l.b16 %v2010
    %v2186 = vunpack.c.h.b16 %v2010
    %v2187 = vunpack.c.l.b16 %v2011
    %v2188 = vunpack.c.h.b16 %v2011
    %v2189 = vunpack.c.l.b16 %v2012
    %v2190 = vunpack.c.h.b16 %v2012
    %v2191 = vunpack.c.l.b16 %v2013
    %v2192 = vunpack.c.h.b16 %v2013
    %v2193 = vunpack.c.l.b16 %v2014
    %v2194 = vunpack.c.h.b16 %v2014
    %v2195 = vunpack.c.l.b16 %v2015
    %v2196 = vunpack.c.h.b16 %v2015
    %v2197 = vunpack.c.l.b16 %v2016
    %v2198 = vunpack.c.h.b16 %v2016
    %v2199 = vunpack.c.l.b16 %v2017
    %v2200 = vunpack.c.h.b16 %v2017
    %v2201 = vunpack.c.l.b16 %v2018
    %v2202 = vunpack.c.h.b16 %v2018
    %v2203 = vunpack.c.l.b16 %v2019
    %v2204 = vunpack.c.h.b16 %v2019
    %v2205 = vunpack.c.l.b16 %v2020
    %v2206 = vunpack.c.h.b16 %v2020
    %v2207 = vunpack.c.l.b16 %v2021
    %v2208 = vunpack.c.h.b16 %v2021
    %v2209 = vunpack.c.l.b16 %v2022
    %v2210 = vunpack.c.h.b16 %v2022
    %v2211 = vunpack.c.l.b16 %v2023
    %v2212 = vunpack.c.h.b16 %v2023
    %v2213 = vunpack.c.l.b16 %v2024
    %v2214 = vunpack.c.h.b16 %v2024
    %v2215 = vunpack.c.l.b16 %v2025
    %v2216 = vunpack.c.h.b16 %v2025
    %v2217 = vunpack.c.l.b16 %v2026
    %v2218 = vunpack.c.h.b16 %v2026
    %v2219 = vunpack.c.l.b16 %v2027
    %v2220 = vunpack.c.h.b16 %v2027
    %v2221 = vunpack.c.l.b16 %v2028
    %v2222 = vunpack.c.h.b16 %v2028
    %v2223 = vunpack.c.l.b16 %v2029
    %v2224 = vunpack.c.h.b16 %v2029
    %v2225 = vunpack.c.l.b16 %v2030
    %v2226 = vunpack.c.h.b16 %v2030
    %v2227 = vunpack.c.l.b16 %v2031
    %v2228 = vunpack.c.h.b16 %v2031
    %v2229 = vunpack.c.l.b16 %v2032
    %v2230 = vunpack.c.h.b16 %v2032
    %v2231 = vunpack.c.l.b16 %v2033
    %v2232 = vunpack.c.h.b16 %v2033
    %v2233 = vunpack.c.l.b16 %v2034
    %v2234 = vunpack.c.h.b16 %v2034
    %v2235 = vunpack.c.l.b16 %v2035
    %v2236 = vunpack.c.h.b16 %v2035
    %v2237 = vunpack.c.l.b16 %v2036
    %v2238 = vunpack.c.h.b16 %v2036
    %v2239 = vunpack.c.l.b16 %v2037
    %v2240 = vunpack.c.h.b16 %v2037
    %v2241 = vunpack.c.l.b16 %v2038
    %v2242 = vunpack.c.h.b16 %v2038
    %v2243 = vpack.c.b16 %v2117, %v2115
    %v2244 = vpack.c.b16 %v2118, %v2116
    %v2245 = vpack.c.b16 %v2121, %v2119
    %v2246 = vpack.c.b16 %v2122, %v2120
    %v2247 = vpack.c.b16 %v2125, %v2123
    %v2248 = vpack.c.b16 %v2126, %v2124
    %v2249 = vpack.c.b16 %v2129, %v2127
    %v2250 = vpack.c.b16 %v2130, %v2128
    %v2251 = vpack.c.b16 %v2133, %v2131
    %v2252 = vpack.c.b16 %v2134, %v2132
    %v2253 = vpack.c.b16 %v2137, %v2135
    %v2254 = vpack.c.b16 %v2138, %v2136
    %v2255 = vpack.c.b16 %v2141, %v2139
    %v2256 = vpack.c.b16 %v2142, %v2140
    %v2257 = vpack.c.b16 %v2145, %v2143
    %v2258 = vpack.c.b16 %v2146, %v2144
    %v2259 = vpack.c.b16 %v2149, %v2147
    %v2260 = vpack.c.b16 %v2150, %v2148
    %v2261 = vpack.c.b16 %v2153, %v2151
    %v2262 = vpack.c.b16 %v2154, %v2152
    %v2263 = vpack.c.b16 %v2157, %v2155
    %v2264 = vpack.c.b16 %v2158, %v2156
    %v2265 = vpack.c.b16 %v2161, %v2159
    %v2266 = vpack.c.b16 %v2162, %v2160
    %v2267 = vpack.c.b16 %v2165, %v2163
    %v2268 = vpack.c.b16 %v2166, %v2164
    %v2269 = vpack.c.b16 %v2169, %v2167
    %v2270 = vpack.c.b16 %v2170, %v2168
    %v2271 = vpack.c.b16 %v2173, %v2171
    %v2272 = vpack.c.b16 %v2174, %v2172
    %v2273 = vpack.c.b16 %v2177, %v2175
    %v2274 = vpack.c.b16 %v2178, %v2176
    %v2275 = vpack.c.b16 %v2181, %v2179
    %v2276 = vpack.c.b16 %v2182, %v2180
    %v2277 = vpack.c.b16 %v2185, %v2183
    %v2278 = vpack.c.b16 %v2186, %v2184
    %v2279 = vpack.c.b16 %v2189, %v2187
    %v2280 = vpack.c.b16 %v2190, %v2188
    %v2281 = vpack.c.b16 %v2193, %v2191
    %v2282 = vpack.c.b16 %v2194, %v2192
    %v2283 = vpack.c.b16 %v2197, %v2195
    %v2284 = vpack.c.b16 %v2198, %v2196
    %v2285 = vpack.c.b16 %v2201, %v2199
    %v2286 = vpack.c.b16 %v2202, %v2200
    %v2287 = vpack.c.b16 %v2205, %v2203
    %v2288 = vpack.c.b16 %v2206, %v2204
    %v2289 = vpack.c.b16 %v2209, %v2207
    %v2290 = vpack.c.b16 %v2210, %v2208
    %v2291 = vpack.c.b16 %v2213, %v2211
    %v2292 = vpack.c.b16 %v2214, %v2212
    %v2293 = vpack.c.b16 %v2217, %v2215
    %v2294 = vpack.c.b16 %v2218, %v2216
    %v2295 = vpack.c.b16 %v2221, %v2219
    %v2296 = vpack.c.b16 %v2222, %v2220
    %v2297 = vpack.c.b16 %v2225, %v2223
    %v2298 = vpack.c.b16 %v2226, %v2224
    %v2299 = vpack.c.b16 %v2229, %v2227
    %v2300 = vpack.c.b16 %v2230, %v2228
    %v2301 = vpack.c.b16 %v2233, %v2231
    %v2302 = vpack.c.b16 %v2234, %v2232
    %v2303 = vpack.c.b16 %v2237, %v2235
    %v2304 = vpack.c.b16 %v2238, %v2236
    %v2305 = vpack.c.b16 %v2241, %v2239
    %v2306 = vpack.c.b16 %v2242, %v2240
    %2371 = vmatprep.subr.bf16.mxu0 %v2244
    %2372 = vmatpush1.bf16.msra.mxu0 %v2243
    %2373 = vmatprep.subr.bf16.mxu0 %v2246
    %2374 = vmatpush1.bf16.msra.mxu0 %v2245
    %2375 = vmatprep.subr.bf16.mxu0 %v2248
    %2376 = vmatpush1.bf16.msra.mxu0 %v2247
    %2377 = vmatprep.subr.bf16.mxu0 %v2250
    %2378 = vmatpush1.bf16.msra.mxu0 %v2249
    %2379 = vmatprep.subr.bf16.mxu0 %v2252
    %2380 = vmatpush1.bf16.msra.mxu0 %v2251
    %2381 = vmatprep.subr.bf16.mxu0 %v2254
    %2382 = vmatpush1.bf16.msra.mxu0 %v2253
    %2383 = vmatprep.subr.bf16.mxu0 %v2256
    %2384 = vmatpush1.bf16.msra.mxu0 %v2255
    %2385 = vmatprep.subr.bf16.mxu0 %v2258
    %2386 = vmatpush1.bf16.msra.mxu0 %v2257
    %2387 = vmatprep.subr.bf16.mxu0 %v2260
    %2388 = vmatpush1.bf16.msra.mxu0 %v2259
    %2389 = vmatprep.subr.bf16.mxu0 %v2262
    %2390 = vmatpush1.bf16.msra.mxu0 %v2261
    %2391 = vmatprep.subr.bf16.mxu0 %v2264
    %2392 = vmatpush1.bf16.msra.mxu0 %v2263
    %2393 = vmatprep.subr.bf16.mxu0 %v2266
    %2394 = vmatpush1.bf16.msra.mxu0 %v2265
    %2395 = vmatprep.subr.bf16.mxu0 %v2268
    %2396 = vmatpush1.bf16.msra.mxu0 %v2267
    %2397 = vmatprep.subr.bf16.mxu0 %v2270
    %2398 = vmatpush1.bf16.msra.mxu0 %v2269
    %2399 = vmatprep.subr.bf16.mxu0 %v2272
    %2400 = vmatpush1.bf16.msra.mxu0 %v2271
    %2401 = vmatprep.subr.bf16.mxu0 %v2274
    %2402 = vmatpush1.bf16.msra.mxu0 %v2273
    %2403 = vmatprep.mubr.bf16.mxu0 %v1972
    %2404 = vmatmul.mubr.bf16.gmra.mrb[0].mxu0 %v1971
    %v2405 = vpop.f32.mrb[0].mxu0
    %v2406 = vadd.f32 %v2044, %v2405
    %v2407 = vpop.f32.mrb[0].mxu0
    %v2408 = vadd.f32 %v2048, %v2407
    %v2409 = vpop.f32.mrb[0].mxu0
    %v2410 = vpop.f32.mrb[0].mxu0
    %2411 = vdwg.mxu0
    %2412 = vmatprep.subr.bf16.mxu0 %v2276
    %2413 = vmatpush1.bf16.msra.mxu0 %v2275
    %2414 = vmatprep.subr.bf16.mxu0 %v2278
    %2415 = vmatpush1.bf16.msra.mxu0 %v2277
    %2416 = vmatprep.subr.bf16.mxu0 %v2280
    %2417 = vmatpush1.bf16.msra.mxu0 %v2279
    %2418 = vmatprep.subr.bf16.mxu0 %v2282
    %2419 = vmatpush1.bf16.msra.mxu0 %v2281
    %2420 = vmatprep.subr.bf16.mxu0 %v2284
    %2421 = vmatpush1.bf16.msra.mxu0 %v2283
    %2422 = vmatprep.subr.bf16.mxu0 %v2286
    %2423 = vmatpush1.bf16.msra.mxu0 %v2285
    %2424 = vmatprep.subr.bf16.mxu0 %v2288
    %2425 = vmatpush1.bf16.msra.mxu0 %v2287
    %2426 = vmatprep.subr.bf16.mxu0 %v2290
    %2427 = vmatpush1.bf16.msra.mxu0 %v2289
    %2428 = vmatprep.subr.bf16.mxu0 %v2292
    %2429 = vmatpush1.bf16.msra.mxu0 %v2291
    %2430 = vmatprep.subr.bf16.mxu0 %v2294
    %2431 = vmatpush1.bf16.msra.mxu0 %v2293
    %2432 = vmatprep.subr.bf16.mxu0 %v2296
    %2433 = vmatpush1.bf16.msra.mxu0 %v2295
    %2434 = vmatprep.subr.bf16.mxu0 %v2298
    %2435 = vmatpush1.bf16.msra.mxu0 %v2297
    %2436 = vmatprep.subr.bf16.mxu0 %v2300
    %2437 = vmatpush1.bf16.msra.mxu0 %v2299
    %2438 = vmatprep.subr.bf16.mxu0 %v2302
    %2439 = vmatpush1.bf16.msra.mxu0 %v2301
    %2440 = vmatprep.subr.bf16.mxu0 %v2304
    %2441 = vmatpush1.bf16.msra.mxu0 %v2303
    %2442 = vmatprep.subr.bf16.mxu0 %v2306
    %2443 = vmatpush1.bf16.msra.mxu0 %v2305
    %2444 = vmatprep.mubr.bf16.mxu0 %v1974
    %2445 = vmatmul.mubr.bf16.gmra.mrb[0].mxu0 %v1973
    %v2446 = vpop.f32.mrb[0].mxu0
    %v2447 = vadd.f32 %v2406, %v2446
    %v2448 = vpop.f32.mrb[0].mxu0
    %v2449 = vadd.f32 %v2408, %v2448
    %v2450 = vpop.f32.mrb[0].mxu0
    %v2451 = vpop.f32.mrb[0].mxu0
    %2452 = vdwg.mxu0
    %2453 = vst [vmem:[%s20] sm:$0xff] %v2447
    %2454 = vst [vmem:[%s20 + $0x8] sm:$0xff] %v2449
    // Predicated region
    $region114: #{cnn_decoder_forward.1} parent=1 // pred_check
      _
    $region115: #{cnn_decoder_forward.1} parent=1 // pred_check_branch
      %2456 = sbr.rel (0) target = $region117
    $region116: #{cnn_decoder_forward.1} parent=1 // pred_region
      _
    $region117: #{cnn_decoder_forward.1} parent=1 // pred_fallthru
      _
    // Predicated region
    $region118: #{cnn_decoder_forward.1} parent=1 // pred_check
      _
    $region119: #{cnn_decoder_forward.1} parent=1 // pred_check_branch
      %2458 = sbr.rel (0) target = $region121
    $region120: #{cnn_decoder_forward.1} parent=1 // pred_region
      _
    $region121: #{cnn_decoder_forward.1} parent=1 // pred_fallthru
      _
    %2459 = vsyncpa [#allocation3], 1
    %2460 = vsyncpa [#allocation5], 1
    %2461 = vsyncpa [#allocation8], 1
    %2462 = vsyncpa [#allocation11], 1
    %2463 = vsyncpa [#allocation14], 1

</llo_original>
